<compile_context>
chip_gen: v7x
topology: tpu7x:2x2x1
jax: 0.10.0
libtpu: 0.0.40
codegen_flags: <defaults>
</compile_context>

<pallas_src>
import math

import jax
import jax.numpy as jnp
from jax.experimental import pallas as pl
from jax.experimental.pallas import tpu as pltpu


# ----------------------------------------------------------------------------
# Fused kernel: grid = (batch, layer).  One grid step = one full encoder layer
# applied to one batch element's (S, E) activation slab.
# ----------------------------------------------------------------------------
def make_fused_encoder_kernel(S, E, H):
    D = E // H
    scale = 1.0 / math.sqrt(D)
    eps = 1e-5
    cdt = jnp.bfloat16  # matmul-operand compute dtype

    def layer_norm(v, w, b):
        mu = jnp.mean(v, axis=-1, keepdims=True)
        var = jnp.mean((v - mu) ** 2, axis=-1, keepdims=True)
        return (v - mu) * jax.lax.rsqrt(var + eps) * w + b

    def kernel(x_ref, wqkv_ref, bqkv_ref, wo_ref, bo_ref,
               ln1w_ref, ln1b_ref, w1_ref, b1_ref, w2_ref, b2_ref,
               ln2w_ref, ln2b_ref, o_ref):
        layer = pl.program_id(1)

        # Layer 0 pulls the HBM input block; later layers reuse the activation
        # already resident in the (revisited) output VMEM buffer.
        @pl.when(layer == 0)
        def _():
            o_ref[...] = x_ref[...]

        x = o_ref[...]                                   # (S, E) f32 residual

        # ---- QKV projection (bf16 operands, f32 accumulation) ----
        qkv = jnp.dot(x.astype(cdt), wqkv_ref[...],
                      preferred_element_type=jnp.float32) + bqkv_ref[...]

        def split_heads(mat):                            # (S, E) -> (H, S, D)
            return jnp.stack(
                [mat[:, h * D:(h + 1) * D] for h in range(H)], axis=0
            ).astype(cdt)

        q3 = split_heads(qkv[:, 0:E] * scale)            # pre-scale Q in f32
        k3 = split_heads(qkv[:, E:2 * E])
        v3 = split_heads(qkv[:, 2 * E:3 * E])

        # ---- attention, all heads in one batched matmul ----
        scores = jax.lax.dot_general(                    # (H, S, S) f32
            q3, k3, (((2,), (2,)), ((0,), (0,))),
            preferred_element_type=jnp.float32)
        m = jnp.max(scores, axis=-1, keepdims=True)
        p = jnp.exp(scores - m)                          # unnormalized probs
        row = jnp.sum(p, axis=-1, keepdims=True)         # (H, S, 1)
        ctx = jax.lax.dot_general(                       # (H, S, D) f32
            p.astype(cdt), v3, (((2,), (1,)), ((0,), (0,))),
            preferred_element_type=jnp.float32)
        ctx = ctx * pl.reciprocal(row, approx=True)      # normalize after P·V

        attn = jnp.concatenate([ctx[h] for h in range(H)], axis=-1)  # (S, E)
        attn = jnp.dot(attn.astype(cdt), wo_ref[...],
                       preferred_element_type=jnp.float32) + bo_ref[...]

        # ---- add & LayerNorm 1 (post-norm), f32 ----
        y = layer_norm(x + attn, ln1w_ref[...], ln1b_ref[...])

        # ---- feed-forward: linear1 -> ReLU -> linear2 ----
        hdn = jnp.dot(y.astype(cdt), w1_ref[...],
                      preferred_element_type=jnp.float32) + b1_ref[...]
        hdn = jnp.maximum(hdn, 0.0)
        ff = jnp.dot(hdn.astype(cdt), w2_ref[...],
                     preferred_element_type=jnp.float32) + b2_ref[...]

        # ---- add & LayerNorm 2 ----
        z = layer_norm(y + ff, ln2w_ref[...], ln2b_ref[...])

        # Stays in VMEM across the layer axis; HBM writeback happens when the
        # batch block index changes (i.e. after the last layer).
        o_ref[...] = z

    return kernel


# ----------------------------------------------------------------------------
# Wrapper: one pallas_call for the whole stack of layers.
# ----------------------------------------------------------------------------
def transformer_model_forward(src, params, nhead):
    """Equivalent of TransformerModel.forward: nlayers fused encoder layers."""
    B, S, E = src.shape
    L = params["wqkv_t"].shape[0]

    kernel = make_fused_encoder_kernel(S, E, nhead)

    weight_names = ["wqkv_t", "bqkv", "wo_t", "bo", "ln1_w", "ln1_b",
                    "w1_t", "b1", "w2_t", "b2", "ln2_w", "ln2_b"]
    weights = [params[n] for n in weight_names]

    act_spec = pl.BlockSpec((pl.Squeezed(), S, E), lambda b, l: (b, 0, 0))
    in_specs = [act_spec]
    in_specs += [
        pl.BlockSpec((pl.Squeezed(),) + w.shape[1:], lambda b, l: (l, 0, 0))
        for w in weights
    ]

    return pl.pallas_call(
        kernel,
        out_shape=jax.ShapeDtypeStruct((B, S, E), jnp.float32),
        grid=(B, L),
        in_specs=in_specs,
        out_specs=pl.BlockSpec((pl.Squeezed(), S, E), lambda b, l: (b, 0, 0)),
        compiler_params=pltpu.CompilerParams(
            dimension_semantics=("parallel", "arbitrary")),
    )(src, *weights)


# ----------------------------------------------------------------------------
# Deterministic synthetic parameters (shapes follow nn.TransformerEncoderLayer),
# stacked over layers; matmul weights stored in bf16, biases / LN params in f32.
# ----------------------------------------------------------------------------
def init_params(key, embed_size, nhid, nlayers):
    E = embed_size
    be = 1.0 / math.sqrt(E)
    bh = 1.0 / math.sqrt(nhid)
    layers = []
    for _ in range(nlayers):
        key, k0, k1, k2, k3, k4, k5, k6, k7 = jax.random.split(key, 9)
        wqkv = jax.random.uniform(k0, (3 * E, E), jnp.float32, -be, be)
        wo = jax.random.uniform(k1, (E, E), jnp.float32, -be, be)
        w1 = jax.random.uniform(k2, (nhid, E), jnp.float32, -be, be)
        w2 = jax.random.uniform(k3, (E, nhid), jnp.float32, -bh, bh)
        layers.append({
            "wqkv_t": wqkv.T,                                        # (E, 3E)
            "bqkv": jax.random.uniform(k4, (1, 3 * E), jnp.float32, -be, be),
            "wo_t": wo.T,                                            # (E, E)
            "bo": jax.random.uniform(k5, (1, E), jnp.float32, -be, be),
            "ln1_w": jnp.ones((1, E), jnp.float32),
            "ln1_b": jnp.zeros((1, E), jnp.float32),
            "w1_t": w1.T,                                            # (E, nhid)
            "b1": jax.random.uniform(k6, (1, nhid), jnp.float32, -be, be),
            "w2_t": w2.T,                                            # (nhid, E)
            "b2": jax.random.uniform(k7, (1, E), jnp.float32, -bh, bh),
            "ln2_w": jnp.ones((1, E), jnp.float32),
            "ln2_b": jnp.zeros((1, E), jnp.float32),
        })

    matmul_weights = ("wqkv_t", "wo_t", "w1_t", "w2_t")
    stacked = {}
    for name in layers[0]:
        arr = jnp.stack([lp[name] for lp in layers], axis=0)
        if name in matmul_weights:
            arr = arr.astype(jnp.bfloat16)
        stacked[name] = arr
    return stacked


if __name__ == "__main__":
    # Small shapes consistent with the module: batch=2, seq=8, embed=32.
    B, S = 2, 8
    embed_size, nhead, nhid, nlayers = 32, 4, 64, 2

    key = jax.random.PRNGKey(0)
    key, ksrc = jax.random.split(key)
    src = jax.random.normal(ksrc, (B, S, embed_size), jnp.float32)

    params = init_params(key, embed_size, nhid, nlayers)

    out = transformer_model_forward(src, params, nhead)
    out = jax.block_until_ready(out)
    assert out.shape == (B, S, embed_size)
    assert bool(jnp.all(jnp.isfinite(out)))
    print("KERNEL_OK")
</pallas_src>

<mosaic_0001>
module attributes {stable_mosaic.version = 11 : i64} {
  func.func @kernel(%arg0: i32, %arg1: i32, %arg2: memref<1x8x32xf32, #tpu.memory_space<vmem>>, %arg3: memref<1x32x96xbf16, #tpu.memory_space<vmem>>, %arg4: memref<1x1x96xf32, #tpu.memory_space<vmem>>, %arg5: memref<1x32x32xbf16, #tpu.memory_space<vmem>>, %arg6: memref<1x1x32xf32, #tpu.memory_space<vmem>>, %arg7: memref<1x1x32xf32, #tpu.memory_space<vmem>>, %arg8: memref<1x1x32xf32, #tpu.memory_space<vmem>>, %arg9: memref<1x32x64xbf16, #tpu.memory_space<vmem>>, %arg10: memref<1x1x64xf32, #tpu.memory_space<vmem>>, %arg11: memref<1x64x32xbf16, #tpu.memory_space<vmem>>, %arg12: memref<1x1x32xf32, #tpu.memory_space<vmem>>, %arg13: memref<1x1x32xf32, #tpu.memory_space<vmem>>, %arg14: memref<1x1x32xf32, #tpu.memory_space<vmem>>, %arg15: memref<1x8x32xf32, #tpu.memory_space<vmem>>) attributes {dimension_semantics = [#tpu.dimension_semantics<parallel>, #tpu.dimension_semantics<arbitrary>], iteration_bounds = array<i64: 2, 2>, scalar_prefetch = 0 : i64, scratch_operands = 0 : i64, tpu.core_type = #tpu.core_type<tc>, window_params = [{transform_indices = @transform_0, window_bounds = array<i64: 1, 8, 32>}, {transform_indices = @transform_1, window_bounds = array<i64: 1, 32, 96>}, {transform_indices = @transform_2, window_bounds = array<i64: 1, 1, 96>}, {transform_indices = @transform_3, window_bounds = array<i64: 1, 32, 32>}, {transform_indices = @transform_4, window_bounds = array<i64: 1, 1, 32>}, {transform_indices = @transform_5, window_bounds = array<i64: 1, 1, 32>}, {transform_indices = @transform_6, window_bounds = array<i64: 1, 1, 32>}, {transform_indices = @transform_7, window_bounds = array<i64: 1, 32, 64>}, {transform_indices = @transform_8, window_bounds = array<i64: 1, 1, 64>}, {transform_indices = @transform_9, window_bounds = array<i64: 1, 64, 32>}, {transform_indices = @transform_10, window_bounds = array<i64: 1, 1, 32>}, {transform_indices = @transform_11, window_bounds = array<i64: 1, 1, 32>}, {transform_indices = @transform_12, window_bounds = array<i64: 1, 1, 32>}, {transform_indices = @transform_13, window_bounds = array<i64: 1, 8, 32>}]} {
    %c0_i32 = arith.constant 0 : i32
    %0 = arith.cmpi eq, %arg1, %c0_i32 : i32
    %1 = arith.extui %0 : i1 to i32
    %c0_i32_0 = arith.constant 0 : i32
    %2 = arith.cmpi ne, %1, %c0_i32_0 : i32
    scf.if %2 {
      %c0_61 = arith.constant 0 : index
      %c0_62 = arith.constant 0 : index
      %c0_63 = arith.constant 0 : index
      %153 = vector.load %arg2[%c0_61, %c0_62, %c0_63] : memref<1x8x32xf32, #tpu.memory_space<vmem>>, vector<1x8x32xf32>
      %154 = vector.shape_cast %153 : vector<1x8x32xf32> to vector<8x32xf32>
      %c0_64 = arith.constant 0 : index
      %c0_65 = arith.constant 0 : index
      %c0_66 = arith.constant 0 : index
      %155 = vector.load %arg15[%c0_64, %c0_65, %c0_66] : memref<1x8x32xf32, #tpu.memory_space<vmem>>, vector<1x8x32xf32>
      %156 = vector.shape_cast %155 : vector<1x8x32xf32> to vector<8x32xf32>
      %157 = vector.shape_cast %154 : vector<8x32xf32> to vector<1x8x32xf32>
      tpu.vector_store %arg15[%c0_64, %c0_65, %c0_66], %157 {strides = array<i32>} : memref<1x8x32xf32, #tpu.memory_space<vmem>>, vector<1x8x32xf32>,
    } else {
    }
    %c0 = arith.constant 0 : index
    %c0_1 = arith.constant 0 : index
    %c0_2 = arith.constant 0 : index
    %3 = vector.load %arg15[%c0, %c0_1, %c0_2] : memref<1x8x32xf32, #tpu.memory_space<vmem>>, vector<1x8x32xf32>
    %4 = vector.shape_cast %3 : vector<1x8x32xf32> to vector<8x32xf32>
    %5 = arith.truncf %4 : vector<8x32xf32> to vector<8x32xbf16>
    %c0_3 = arith.constant 0 : index
    %c0_4 = arith.constant 0 : index
    %c0_5 = arith.constant 0 : index
    %6 = vector.load %arg3[%c0_3, %c0_4, %c0_5] : memref<1x32x96xbf16, #tpu.memory_space<vmem>>, vector<1x32x96xbf16>
    %7 = vector.shape_cast %6 : vector<1x32x96xbf16> to vector<32x96xbf16>
    %cst = arith.constant dense<0.000000e+00> : vector<8x96xf32>
    %8 = tpu.matmul %5, %7, %cst {dimension_numbers = #tpu.dot_dimension_numbers<[1], [0], [0], [1], [0, 0, 1, 1], [], []>} : vector<8x32xbf16>, vector<32x96xbf16>, vector<8x96xf32> -> vector<8x96xf32>
    %c0_6 = arith.constant 0 : index
    %c0_7 = arith.constant 0 : index
    %c0_8 = arith.constant 0 : index
    %9 = vector.load %arg4[%c0_6, %c0_7, %c0_8] : memref<1x1x96xf32, #tpu.memory_space<vmem>>, vector<1x1x96xf32>
    %10 = vector.shape_cast %9 : vector<1x1x96xf32> to vector<1x96xf32>
    %11 = vector.broadcast %10 : vector<1x96xf32> to vector<8x96xf32>
    %12 = arith.addf %8, %11 : vector<8x96xf32>
    %13 = vector.extract_strided_slice %12 {offsets = [0, 0], sizes = [8, 32], strides = [1, 1]} : vector<8x96xf32> to vector<8x32xf32>
    %cst_9 = arith.constant 0.353553385 : f32
    %14 = vector.broadcast %cst_9 : f32 to vector<8x32xf32>
    %15 = arith.mulf %13, %14 : vector<8x32xf32>
    %16 = vector.extract_strided_slice %15 {offsets = [0, 0], sizes = [8, 8], strides = [1, 1]} : vector<8x32xf32> to vector<8x8xf32>
    %17 = vector.extract_strided_slice %15 {offsets = [0, 8], sizes = [8, 8], strides = [1, 1]} : vector<8x32xf32> to vector<8x8xf32>
    %18 = vector.extract_strided_slice %15 {offsets = [0, 16], sizes = [8, 8], strides = [1, 1]} : vector<8x32xf32> to vector<8x8xf32>
    %19 = vector.extract_strided_slice %15 {offsets = [0, 24], sizes = [8, 8], strides = [1, 1]} : vector<8x32xf32> to vector<8x8xf32>
    %20 = vector.shape_cast %16 : vector<8x8xf32> to vector<1x8x8xf32>
    %21 = vector.shape_cast %17 : vector<8x8xf32> to vector<1x8x8xf32>
    %22 = vector.shape_cast %18 : vector<8x8xf32> to vector<1x8x8xf32>
    %23 = vector.shape_cast %19 : vector<8x8xf32> to vector<1x8x8xf32>
    %24 = tpu.concatenate %20, %21, %22, %23 in 0 : vector<1x8x8xf32>, vector<1x8x8xf32>, vector<1x8x8xf32>, vector<1x8x8xf32> -> vector<4x8x8xf32>
    %25 = arith.truncf %24 : vector<4x8x8xf32> to vector<4x8x8xbf16>
    %26 = vector.extract_strided_slice %12 {offsets = [0, 32], sizes = [8, 32], strides = [1, 1]} : vector<8x96xf32> to vector<8x32xf32>
    %27 = vector.extract_strided_slice %26 {offsets = [0, 0], sizes = [8, 8], strides = [1, 1]} : vector<8x32xf32> to vector<8x8xf32>
    %28 = vector.extract_strided_slice %26 {offsets = [0, 8], sizes = [8, 8], strides = [1, 1]} : vector<8x32xf32> to vector<8x8xf32>
    %29 = vector.extract_strided_slice %26 {offsets = [0, 16], sizes = [8, 8], strides = [1, 1]} : vector<8x32xf32> to vector<8x8xf32>
    %30 = vector.extract_strided_slice %26 {offsets = [0, 24], sizes = [8, 8], strides = [1, 1]} : vector<8x32xf32> to vector<8x8xf32>
    %31 = vector.shape_cast %27 : vector<8x8xf32> to vector<1x8x8xf32>
    %32 = vector.shape_cast %28 : vector<8x8xf32> to vector<1x8x8xf32>
    %33 = vector.shape_cast %29 : vector<8x8xf32> to vector<1x8x8xf32>
    %34 = vector.shape_cast %30 : vector<8x8xf32> to vector<1x8x8xf32>
    %35 = tpu.concatenate %31, %32, %33, %34 in 0 : vector<1x8x8xf32>, vector<1x8x8xf32>, vector<1x8x8xf32>, vector<1x8x8xf32> -> vector<4x8x8xf32>
    %36 = arith.truncf %35 : vector<4x8x8xf32> to vector<4x8x8xbf16>
    %37 = vector.extract_strided_slice %12 {offsets = [0, 64], sizes = [8, 32], strides = [1, 1]} : vector<8x96xf32> to vector<8x32xf32>
    %38 = vector.extract_strided_slice %37 {offsets = [0, 0], sizes = [8, 8], strides = [1, 1]} : vector<8x32xf32> to vector<8x8xf32>
    %39 = vector.extract_strided_slice %37 {offsets = [0, 8], sizes = [8, 8], strides = [1, 1]} : vector<8x32xf32> to vector<8x8xf32>
    %40 = vector.extract_strided_slice %37 {offsets = [0, 16], sizes = [8, 8], strides = [1, 1]} : vector<8x32xf32> to vector<8x8xf32>
    %41 = vector.extract_strided_slice %37 {offsets = [0, 24], sizes = [8, 8], strides = [1, 1]} : vector<8x32xf32> to vector<8x8xf32>
    %42 = vector.shape_cast %38 : vector<8x8xf32> to vector<1x8x8xf32>
    %43 = vector.shape_cast %39 : vector<8x8xf32> to vector<1x8x8xf32>
    %44 = vector.shape_cast %40 : vector<8x8xf32> to vector<1x8x8xf32>
    %45 = vector.shape_cast %41 : vector<8x8xf32> to vector<1x8x8xf32>
    %46 = tpu.concatenate %42, %43, %44, %45 in 0 : vector<1x8x8xf32>, vector<1x8x8xf32>, vector<1x8x8xf32>, vector<1x8x8xf32> -> vector<4x8x8xf32>
    %47 = arith.truncf %46 : vector<4x8x8xf32> to vector<4x8x8xbf16>
    %cst_10 = arith.constant dense<0.000000e+00> : vector<4x8x8xf32>
    %48 = tpu.matmul %25, %36, %cst_10 {dimension_numbers = #tpu.dot_dimension_numbers<[2], [2], [1], [1], [0, 0, 0, 1, 1, 1], [0], [0]>} : vector<4x8x8xbf16>, vector<4x8x8xbf16>, vector<4x8x8xf32> -> vector<4x8x8xf32>
    %cst_11 = arith.constant dense<0xFF800000> : vector<4x8xf32>
    %49 = vector.multi_reduction <maximumf>, %48, %cst_11 [2] : vector<4x8x8xf32> to vector<4x8xf32>
    %50 = vector.shape_cast %49 : vector<4x8xf32> to vector<4x8x1xf32>
    %51 = vector.broadcast %50 : vector<4x8x1xf32> to vector<4x8x8xf32>
    %52 = arith.subf %48, %51 : vector<4x8x8xf32>
    %53 = math.exp %52 : vector<4x8x8xf32>
    %cst_12 = arith.constant dense<0.000000e+00> : vector<4x8xf32>
    %54 = vector.multi_reduction <add>, %53, %cst_12 [2] : vector<4x8x8xf32> to vector<4x8xf32>
    %55 = vector.shape_cast %54 : vector<4x8xf32> to vector<4x8x1xf32>
    %56 = arith.truncf %53 : vector<4x8x8xf32> to vector<4x8x8xbf16>
    %cst_13 = arith.constant dense<0.000000e+00> : vector<4x8x8xf32>
    %57 = tpu.matmul %56, %47, %cst_13 {dimension_numbers = #tpu.dot_dimension_numbers<[2], [1], [1], [2], [0, 0, 0, 1, 1, 2], [0], [0]>} : vector<4x8x8xbf16>, vector<4x8x8xbf16>, vector<4x8x8xf32> -> vector<4x8x8xf32>
    %58 = tpu.reciprocal %55 {approx = true} : vector<4x8x1xf32> -> vector<4x8x1xf32>
    %59 = vector.broadcast %58 : vector<4x8x1xf32> to vector<4x8x8xf32>
    %60 = arith.mulf %57, %59 : vector<4x8x8xf32>
    %61 = vector.extract_strided_slice %60 {offsets = [0, 0, 0], sizes = [1, 8, 8], strides = [1, 1, 1]} : vector<4x8x8xf32> to vector<1x8x8xf32>
    %62 = vector.shape_cast %61 : vector<1x8x8xf32> to vector<8x8xf32>
    %63 = vector.extract_strided_slice %60 {offsets = [1, 0, 0], sizes = [1, 8, 8], strides = [1, 1, 1]} : vector<4x8x8xf32> to vector<1x8x8xf32>
    %64 = vector.shape_cast %63 : vector<1x8x8xf32> to vector<8x8xf32>
    %65 = vector.extract_strided_slice %60 {offsets = [2, 0, 0], sizes = [1, 8, 8], strides = [1, 1, 1]} : vector<4x8x8xf32> to vector<1x8x8xf32>
    %66 = vector.shape_cast %65 : vector<1x8x8xf32> to vector<8x8xf32>
    %67 = vector.extract_strided_slice %60 {offsets = [3, 0, 0], sizes = [1, 8, 8], strides = [1, 1, 1]} : vector<4x8x8xf32> to vector<1x8x8xf32>
    %68 = vector.shape_cast %67 : vector<1x8x8xf32> to vector<8x8xf32>
    %69 = tpu.concatenate %62, %64, %66, %68 in 1 : vector<8x8xf32>, vector<8x8xf32>, vector<8x8xf32>, vector<8x8xf32> -> vector<8x32xf32>
    %70 = arith.truncf %69 : vector<8x32xf32> to vector<8x32xbf16>
    %c0_14 = arith.constant 0 : index
    %c0_15 = arith.constant 0 : index
    %c0_16 = arith.constant 0 : index
    %71 = vector.load %arg5[%c0_14, %c0_15, %c0_16] : memref<1x32x32xbf16, #tpu.memory_space<vmem>>, vector<1x32x32xbf16>
    %72 = vector.shape_cast %71 : vector<1x32x32xbf16> to vector<32x32xbf16>
    %cst_17 = arith.constant dense<0.000000e+00> : vector<8x32xf32>
    %73 = tpu.matmul %70, %72, %cst_17 {dimension_numbers = #tpu.dot_dimension_numbers<[1], [0], [0], [1], [0, 0, 1, 1], [], []>} : vector<8x32xbf16>, vector<32x32xbf16>, vector<8x32xf32> -> vector<8x32xf32>
    %c0_18 = arith.constant 0 : index
    %c0_19 = arith.constant 0 : index
    %c0_20 = arith.constant 0 : index
    %74 = vector.load %arg6[%c0_18, %c0_19, %c0_20] : memref<1x1x32xf32, #tpu.memory_space<vmem>>, vector<1x1x32xf32>
    %75 = vector.shape_cast %74 : vector<1x1x32xf32> to vector<1x32xf32>
    %76 = vector.broadcast %75 : vector<1x32xf32> to vector<8x32xf32>
    %77 = arith.addf %73, %76 : vector<8x32xf32>
    %78 = arith.addf %4, %77 : vector<8x32xf32>
    %c0_21 = arith.constant 0 : index
    %c0_22 = arith.constant 0 : index
    %c0_23 = arith.constant 0 : index
    %79 = vector.load %arg7[%c0_21, %c0_22, %c0_23] : memref<1x1x32xf32, #tpu.memory_space<vmem>>, vector<1x1x32xf32>
    %80 = vector.shape_cast %79 : vector<1x1x32xf32> to vector<1x32xf32>
    %c0_24 = arith.constant 0 : index
    %c0_25 = arith.constant 0 : index
    %c0_26 = arith.constant 0 : index
    %81 = vector.load %arg8[%c0_24, %c0_25, %c0_26] : memref<1x1x32xf32, #tpu.memory_space<vmem>>, vector<1x1x32xf32>
    %82 = vector.shape_cast %81 : vector<1x1x32xf32> to vector<1x32xf32>
    %cst_27 = arith.constant dense<0.000000e+00> : vector<8xf32>
    %83 = vector.multi_reduction <add>, %78, %cst_27 [1] : vector<8x32xf32> to vector<8xf32>
    %84 = vector.shape_cast %83 : vector<8xf32> to vector<8x1xf32>
    %cst_28 = arith.constant 3.200000e+01 : f32
    %85 = vector.broadcast %cst_28 : f32 to vector<8x1xf32>
    %86 = arith.divf %84, %85 : vector<8x1xf32>
    %87 = vector.broadcast %86 : vector<8x1xf32> to vector<8x32xf32>
    %88 = arith.subf %78, %87 : vector<8x32xf32>
    %89 = arith.mulf %88, %88 : vector<8x32xf32>
    %cst_29 = arith.constant dense<0.000000e+00> : vector<8xf32>
    %90 = vector.multi_reduction <add>, %89, %cst_29 [1] : vector<8x32xf32> to vector<8xf32>
    %91 = vector.shape_cast %90 : vector<8xf32> to vector<8x1xf32>
    %cst_30 = arith.constant 3.200000e+01 : f32
    %92 = vector.broadcast %cst_30 : f32 to vector<8x1xf32>
    %93 = arith.divf %91, %92 : vector<8x1xf32>
    %94 = vector.broadcast %86 : vector<8x1xf32> to vector<8x32xf32>
    %95 = arith.subf %78, %94 : vector<8x32xf32>
    %cst_31 = arith.constant 9.99999974E-6 : f32
    %96 = vector.broadcast %cst_31 : f32 to vector<8x1xf32>
    %97 = arith.addf %93, %96 : vector<8x1xf32>
    %98 = math.rsqrt %97 : vector<8x1xf32>
    %99 = vector.broadcast %98 : vector<8x1xf32> to vector<8x32xf32>
    %100 = arith.mulf %95, %99 : vector<8x32xf32>
    %101 = vector.broadcast %80 : vector<1x32xf32> to vector<8x32xf32>
    %102 = arith.mulf %100, %101 : vector<8x32xf32>
    %103 = vector.broadcast %82 : vector<1x32xf32> to vector<8x32xf32>
    %104 = arith.addf %102, %103 : vector<8x32xf32>
    %105 = arith.truncf %104 : vector<8x32xf32> to vector<8x32xbf16>
    %c0_32 = arith.constant 0 : index
    %c0_33 = arith.constant 0 : index
    %c0_34 = arith.constant 0 : index
    %106 = vector.load %arg9[%c0_32, %c0_33, %c0_34] : memref<1x32x64xbf16, #tpu.memory_space<vmem>>, vector<1x32x64xbf16>
    %107 = vector.shape_cast %106 : vector<1x32x64xbf16> to vector<32x64xbf16>
    %cst_35 = arith.constant dense<0.000000e+00> : vector<8x64xf32>
    %108 = tpu.matmul %105, %107, %cst_35 {dimension_numbers = #tpu.dot_dimension_numbers<[1], [0], [0], [1], [0, 0, 1, 1], [], []>} : vector<8x32xbf16>, vector<32x64xbf16>, vector<8x64xf32> -> vector<8x64xf32>
    %c0_36 = arith.constant 0 : index
    %c0_37 = arith.constant 0 : index
    %c0_38 = arith.constant 0 : index
    %109 = vector.load %arg10[%c0_36, %c0_37, %c0_38] : memref<1x1x64xf32, #tpu.memory_space<vmem>>, vector<1x1x64xf32>
    %110 = vector.shape_cast %109 : vector<1x1x64xf32> to vector<1x64xf32>
    %111 = vector.broadcast %110 : vector<1x64xf32> to vector<8x64xf32>
    %112 = arith.addf %108, %111 : vector<8x64xf32>
    %cst_39 = arith.constant 0.000000e+00 : f32
    %113 = vector.broadcast %cst_39 : f32 to vector<8x64xf32>
    %114 = arith.maximumf %112, %113 : vector<8x64xf32>
    %115 = arith.truncf %114 : vector<8x64xf32> to vector<8x64xbf16>
    %c0_40 = arith.constant 0 : index
    %c0_41 = arith.constant 0 : index
    %c0_42 = arith.constant 0 : index
    %116 = vector.load %arg11[%c0_40, %c0_41, %c0_42] : memref<1x64x32xbf16, #tpu.memory_space<vmem>>, vector<1x64x32xbf16>
    %117 = vector.shape_cast %116 : vector<1x64x32xbf16> to vector<64x32xbf16>
    %cst_43 = arith.constant dense<0.000000e+00> : vector<8x32xf32>
    %118 = tpu.matmul %115, %117, %cst_43 {dimension_numbers = #tpu.dot_dimension_numbers<[1], [0], [0], [1], [0, 0, 1, 1], [], []>} : vector<8x64xbf16>, vector<64x32xbf16>, vector<8x32xf32> -> vector<8x32xf32>
    %c0_44 = arith.constant 0 : index
    %c0_45 = arith.constant 0 : index
    %c0_46 = arith.constant 0 : index
    %119 = vector.load %arg12[%c0_44, %c0_45, %c0_46] : memref<1x1x32xf32, #tpu.memory_space<vmem>>, vector<1x1x32xf32>
    %120 = vector.shape_cast %119 : vector<1x1x32xf32> to vector<1x32xf32>
    %121 = vector.broadcast %120 : vector<1x32xf32> to vector<8x32xf32>
    %122 = arith.addf %118, %121 : vector<8x32xf32>
    %123 = arith.addf %104, %122 : vector<8x32xf32>
    %c0_47 = arith.constant 0 : index
    %c0_48 = arith.constant 0 : index
    %c0_49 = arith.constant 0 : index
    %124 = vector.load %arg13[%c0_47, %c0_48, %c0_49] : memref<1x1x32xf32, #tpu.memory_space<vmem>>, vector<1x1x32xf32>
    %125 = vector.shape_cast %124 : vector<1x1x32xf32> to vector<1x32xf32>
    %c0_50 = arith.constant 0 : index
    %c0_51 = arith.constant 0 : index
    %c0_52 = arith.constant 0 : index
    %126 = vector.load %arg14[%c0_50, %c0_51, %c0_52] : memref<1x1x32xf32, #tpu.memory_space<vmem>>, vector<1x1x32xf32>
    %127 = vector.shape_cast %126 : vector<1x1x32xf32> to vector<1x32xf32>
    %cst_53 = arith.constant dense<0.000000e+00> : vector<8xf32>
    %128 = vector.multi_reduction <add>, %123, %cst_53 [1] : vector<8x32xf32> to vector<8xf32>
    %129 = vector.shape_cast %128 : vector<8xf32> to vector<8x1xf32>
    %cst_54 = arith.constant 3.200000e+01 : f32
    %130 = vector.broadcast %cst_54 : f32 to vector<8x1xf32>
    %131 = arith.divf %129, %130 : vector<8x1xf32>
    %132 = vector.broadcast %131 : vector<8x1xf32> to vector<8x32xf32>
    %133 = arith.subf %123, %132 : vector<8x32xf32>
    %134 = arith.mulf %133, %133 : vector<8x32xf32>
    %cst_55 = arith.constant dense<0.000000e+00> : vector<8xf32>
    %135 = vector.multi_reduction <add>, %134, %cst_55 [1] : vector<8x32xf32> to vector<8xf32>
    %136 = vector.shape_cast %135 : vector<8xf32> to vector<8x1xf32>
    %cst_56 = arith.constant 3.200000e+01 : f32
    %137 = vector.broadcast %cst_56 : f32 to vector<8x1xf32>
    %138 = arith.divf %136, %137 : vector<8x1xf32>
    %139 = vector.broadcast %131 : vector<8x1xf32> to vector<8x32xf32>
    %140 = arith.subf %123, %139 : vector<8x32xf32>
    %cst_57 = arith.constant 9.99999974E-6 : f32
    %141 = vector.broadcast %cst_57 : f32 to vector<8x1xf32>
    %142 = arith.addf %138, %141 : vector<8x1xf32>
    %143 = math.rsqrt %142 : vector<8x1xf32>
    %144 = vector.broadcast %143 : vector<8x1xf32> to vector<8x32xf32>
    %145 = arith.mulf %140, %144 : vector<8x32xf32>
    %146 = vector.broadcast %125 : vector<1x32xf32> to vector<8x32xf32>
    %147 = arith.mulf %145, %146 : vector<8x32xf32>
    %148 = vector.broadcast %127 : vector<1x32xf32> to vector<8x32xf32>
    %149 = arith.addf %147, %148 : vector<8x32xf32>
    %c0_58 = arith.constant 0 : index
    %c0_59 = arith.constant 0 : index
    %c0_60 = arith.constant 0 : index
    %150 = vector.load %arg15[%c0_58, %c0_59, %c0_60] : memref<1x8x32xf32, #tpu.memory_space<vmem>>, vector<1x8x32xf32>
    %151 = vector.shape_cast %150 : vector<1x8x32xf32> to vector<8x32xf32>
    %152 = vector.shape_cast %149 : vector<8x32xf32> to vector<1x8x32xf32>
    tpu.vector_store %arg15[%c0_58, %c0_59, %c0_60], %152 {strides = array<i32>} : memref<1x8x32xf32, #tpu.memory_space<vmem>>, vector<1x8x32xf32>,
    return
  }
  func.func @transform_0(%arg0: i32, %arg1: i32) -> (i32, i32, i32) {
    %c0_i32 = arith.constant 0 : i32
    %c0_i32_0 = arith.constant 0 : i32
    %c0_i32_1 = arith.constant 0 : i32
    return %arg0, %c0_i32, %c0_i32_0 : i32, i32, i32
  }
  func.func @transform_1(%arg0: i32, %arg1: i32) -> (i32, i32, i32) {
    %c0_i32 = arith.constant 0 : i32
    %c0_i32_0 = arith.constant 0 : i32
    %c0_i32_1 = arith.constant 0 : i32
    return %arg1, %c0_i32, %c0_i32_0 : i32, i32, i32
  }
  func.func @transform_2(%arg0: i32, %arg1: i32) -> (i32, i32, i32) {
    %c0_i32 = arith.constant 0 : i32
    %c0_i32_0 = arith.constant 0 : i32
    %c0_i32_1 = arith.constant 0 : i32
    return %arg1, %c0_i32, %c0_i32_0 : i32, i32, i32
  }
  func.func @transform_3(%arg0: i32, %arg1: i32) -> (i32, i32, i32) {
    %c0_i32 = arith.constant 0 : i32
    %c0_i32_0 = arith.constant 0 : i32
    %c0_i32_1 = arith.constant 0 : i32
    return %arg1, %c0_i32, %c0_i32_0 : i32, i32, i32
  }
  func.func @transform_4(%arg0: i32, %arg1: i32) -> (i32, i32, i32) {
    %c0_i32 = arith.constant 0 : i32
    %c0_i32_0 = arith.constant 0 : i32
    %c0_i32_1 = arith.constant 0 : i32
    return %arg1, %c0_i32, %c0_i32_0 : i32, i32, i32
  }
  func.func @transform_5(%arg0: i32, %arg1: i32) -> (i32, i32, i32) {
    %c0_i32 = arith.constant 0 : i32
    %c0_i32_0 = arith.constant 0 : i32
    %c0_i32_1 = arith.constant 0 : i32
    return %arg1, %c0_i32, %c0_i32_0 : i32, i32, i32
  }
  func.func @transform_6(%arg0: i32, %arg1: i32) -> (i32, i32, i32) {
    %c0_i32 = arith.constant 0 : i32
    %c0_i32_0 = arith.constant 0 : i32
    %c0_i32_1 = arith.constant 0 : i32
    return %arg1, %c0_i32, %c0_i32_0 : i32, i32, i32
  }
  func.func @transform_7(%arg0: i32, %arg1: i32) -> (i32, i32, i32) {
    %c0_i32 = arith.constant 0 : i32
    %c0_i32_0 = arith.constant 0 : i32
    %c0_i32_1 = arith.constant 0 : i32
    return %arg1, %c0_i32, %c0_i32_0 : i32, i32, i32
  }
  func.func @transform_8(%arg0: i32, %arg1: i32) -> (i32, i32, i32) {
    %c0_i32 = arith.constant 0 : i32
    %c0_i32_0 = arith.constant 0 : i32
    %c0_i32_1 = arith.constant 0 : i32
    return %arg1, %c0_i32, %c0_i32_0 : i32, i32, i32
  }
  func.func @transform_9(%arg0: i32, %arg1: i32) -> (i32, i32, i32) {
    %c0_i32 = arith.constant 0 : i32
    %c0_i32_0 = arith.constant 0 : i32
    %c0_i32_1 = arith.constant 0 : i32
    return %arg1, %c0_i32, %c0_i32_0 : i32, i32, i32
  }
  func.func @transform_10(%arg0: i32, %arg1: i32) -> (i32, i32, i32) {
    %c0_i32 = arith.constant 0 : i32
    %c0_i32_0 = arith.constant 0 : i32
    %c0_i32_1 = arith.constant 0 : i32
    return %arg1, %c0_i32, %c0_i32_0 : i32, i32, i32
  }
  func.func @transform_11(%arg0: i32, %arg1: i32) -> (i32, i32, i32) {
    %c0_i32 = arith.constant 0 : i32
    %c0_i32_0 = arith.constant 0 : i32
    %c0_i32_1 = arith.constant 0 : i32
    return %arg1, %c0_i32, %c0_i32_0 : i32, i32, i32
  }
  func.func @transform_12(%arg0: i32, %arg1: i32) -> (i32, i32, i32) {
    %c0_i32 = arith.constant 0 : i32
    %c0_i32_0 = arith.constant 0 : i32
    %c0_i32_1 = arith.constant 0 : i32
    return %arg1, %c0_i32, %c0_i32_0 : i32, i32, i32
  }
  func.func @transform_13(%arg0: i32, %arg1: i32) -> (i32, i32, i32) {
    %c0_i32 = arith.constant 0 : i32
    %c0_i32_0 = arith.constant 0 : i32
    %c0_i32_1 = arith.constant 0 : i32
    return %arg0, %c0_i32, %c0_i32_0 : i32, i32, i32
  }
}

</mosaic_0001>

<llo_original>
// kernel: tpu_custom_call.1
$region0: #{tpu_custom_call.1}
  #allocation0 [shape = 'u32[]', space=smem, size = 0x4, offset = 0x4, fixed_abs, tag = 'smem constant byte address 0x4 - core index']
  #allocation1 [shape = 'u32[144,128]{1,0:T(1,128)}', space=vmem, size = 0x12000, scoped, tag = 'internal scratch']
  %s0 = inlined_call_operand.hbm [shape: f32[2,8,32], index: 0, kind: input, shape index: {}]
  %s1 = inlined_call_operand.vmem [shape: bf16[2,32,96], index: 1, kind: input, shape index: {}]
  %s2 = inlined_call_operand.vmem [shape: f32[2,1,96], index: 2, kind: input, shape index: {}]
  %s3 = inlined_call_operand.vmem [shape: bf16[2,32,32], index: 3, kind: input, shape index: {}]
  %s4 = inlined_call_operand.hbm [shape: f32[2,1,32], index: 4, kind: input, shape index: {}]
  %s5 = inlined_call_operand.hbm [shape: f32[2,1,32], index: 5, kind: input, shape index: {}]
  %s6 = inlined_call_operand.hbm [shape: f32[2,1,32], index: 6, kind: input, shape index: {}]
  %s7 = inlined_call_operand.vmem [shape: bf16[2,32,64], index: 7, kind: input, shape index: {}]
  %s8 = inlined_call_operand.hbm [shape: f32[2,1,64], index: 8, kind: input, shape index: {}]
  %s9 = inlined_call_operand.vmem [shape: bf16[2,64,32], index: 9, kind: input, shape index: {}]
  %s10 = inlined_call_operand.vmem [shape: f32[2,1,32], index: 10, kind: input, shape index: {}]
  %s11 = inlined_call_operand.vmem [shape: f32[2,1,32], index: 11, kind: input, shape index: {}]
  %s12 = inlined_call_operand.vmem [shape: f32[2,1,32], index: 12, kind: input, shape index: {}]
  %s13 = inlined_call_operand.hbm [shape: f32[2,8,32], index: 13, kind: output, shape index: {}]
  %s14 = sld [smem:[#allocation0]]
  $region109: #{tpu_custom_call.1} parent=0
    _
  %s16 = ssub.s32 1, %s14
  %s17 = scalar_select 0, %s16, %s14
  $region1: #{tpu_custom_call.1} parent=0
    #allocation2 [shape = 'u8[8192]{0}', space=vmem, size = 0x2000, scoped, tag = 'input window, operand 0']
    #allocation3 [shape = 's32[2]{0}', space=sflag, size = 0x8, scoped, tag = 'scoped memory for tpu_custom_call.1']
    #allocation4 [shape = 's32[2]{0}', space=sflag, size = 0x8, scoped, tag = 'scoped memory for tpu_custom_call.1']
    #allocation5 [shape = 'u8[1024]{0}', space=vmem, size = 0x400, scoped, tag = 'input window, operand 4']
    #allocation6 [shape = 's32[2]{0}', space=sflag, size = 0x8, scoped, tag = 'scoped memory for tpu_custom_call.1']
    #allocation7 [shape = 'u8[1024]{0}', space=vmem, size = 0x400, scoped, tag = 'input window, operand 5']
    #allocation8 [shape = 'u8[1024]{0}', space=vmem, size = 0x400, scoped, tag = 'input window, operand 6']
    #allocation9 [shape = 's32[2]{0}', space=sflag, size = 0x8, scoped, tag = 'scoped memory for tpu_custom_call.1']
    #allocation10 [shape = 'u8[1024]{0}', space=vmem, size = 0x400, scoped, tag = 'input window, operand 8']
    #allocation11 [shape = 'u8[8192]{0}', space=vmem, size = 0x2000, scoped, tag = 'output window, operand 0']
    %18 = vsyncpa [#allocation3], 0
    %s19 = scalar_lea.sflag [#allocation3], 1
    %20 = vsyncpa %s19, 0
    %21 = vsyncpa [#allocation6], 0
    %s22 = scalar_lea.sflag [#allocation6], 1
    %23 = vsyncpa %s22, 0
    %24 = vsyncpa [#allocation9], 0
    %s25 = scalar_lea.sflag [#allocation9], 1
    %26 = vsyncpa %s25, 0
    %27 = vsyncpa [#allocation4], 0
    %s28 = scalar_lea.sflag [#allocation4], 1
    %29 = vsyncpa %s28, 0
    loop: start=0, step=1, limit=6
    $region2: #{tpu_custom_call.1} parent=1 // loop_pre_header
      _
    $region3: #{tpu_custom_call.1} parent=1 // loop_header
      %s31 = sphi 0, %s35
      %p32 = scmp.ge.s32.totalorder %s31, 6
      %s38 = sphi 0, %s50
      %s39 = sphi 0, %s46
      %s40 = sphi 0, %s38
      %s41 = sphi 0, %s39
      %s42 = sphi 0, %s40
      %s43 = sphi 0, %s41
      %s53 = sphi 0, %s55
      %s56 = sphi 0, %s53
      %s57 = sphi 0, %s56
      %s73 = sphi 0, %s57
      %s79 = sphi 0, %s81
      %s82 = sphi 0, %s79
      %s83 = sphi 0, %s82
      %s99 = sphi 0, %s83
      %s105 = sphi 0, %s107
      %s108 = sphi 0, %s105
      %s109 = sphi 0, %s108
      %s125 = sphi 0, %s109
      %s131 = sphi 0, %s133
      %s134 = sphi 0, %s131
      %s135 = sphi 0, %s134
      %s151 = sphi 0, %s135
      %s157 = sphi 0, %s159
      %s160 = sphi 0, %s157
      %s161 = sphi 0, %s160
      %s177 = sphi 0, %s161
      %s183 = sphi 0, %s185
      %s186 = sphi 0, %s183
      %s187 = sphi 0, %s186
      %s203 = sphi 0, %s187
      %s209 = sphi 0, %s211
      %s212 = sphi 0, %s209
      %s213 = sphi 0, %s212
      %s229 = sphi 0, %s213
      %s235 = sphi 0, %s237
      %s238 = sphi 0, %s235
      %s239 = sphi 0, %s238
      %s255 = sphi 0, %s239
      %s261 = sphi 0, %s263
      %s264 = sphi 0, %s261
      %s265 = sphi 0, %s264
      %s281 = sphi 0, %s265
      %s287 = sphi 0, %s289
      %s290 = sphi 0, %s287
      %s291 = sphi 0, %s290
      %s307 = sphi 0, %s291
      %s313 = sphi 0, %s315
      %s316 = sphi 0, %s313
      %s317 = sphi 0, %s316
      %s333 = sphi 0, %s317
      %s339 = sphi 0, %s341
      %s342 = sphi 0, %s339
      %s343 = sphi 0, %s342
      %s359 = sphi 0, %s343
      %s365 = sphi 0, %s367
      %s368 = sphi 0, %s365
      %s369 = sphi 0, %s368
      %s385 = sphi 0, %s369
      %s391 = sphi 0, %s393
      %s394 = sphi 0, %s391
      %s395 = sphi 0, %s394
      %s411 = sphi 0, %s395
    $region4: #{tpu_custom_call.1} parent=1 // loop_header_branch
      %34 = sbr.rel (%p32) target = $region8
    $region5: #{tpu_custom_call.1} parent=1 // loop_body
      %s36 = ssub.s32 %s31, 1
      %s37 = ssub.s32 %s31, 2
      %s44 = sadd.s32 1, %s39
      %p45 = scmp.ge.s32.totalorder %s44, 2
      %s46 = scalar_select %p45, 0, %s44
      %s47 = sadd.s32 1, %s38
      %s48 = scalar_select %p45, %s47, %s38
      %p49 = scmp.ge.s32.totalorder %s48, 2
      %s50 = scalar_select %p49, 0, %s48
      %s51 = ssub.s32 %s38, %s50
      %p52 = scmp.eq.s32.totalorder %s51, 0
      %s54 = sadd.s32 %s53, 1
      %s55 = scalar_select %p52, %s53, %s54
      %p58 = pneg %p52
      %p59 = scmp.eq.s32.totalorder %s31, 3
      %p60 = por %p58, %p59
      %p61 = scmp.ne.s32.totalorder %s53, %s56
      %p62 = scmp.eq.s32.totalorder %s31, 0
      %p63 = por %p61, %p62
      %p64 = scmp.ne.s32.totalorder %s53, %s56
      %p65 = scmp.eq.s32.totalorder %s36, 3
      %p66 = por %p64, %p65
      %p67 = scmp.ne.s32.totalorder %s56, %s57
      %p68 = scmp.eq.s32.totalorder %s36, 0
      %p69 = por %p67, %p68
      %p70 = scmp.ne.s32.totalorder %s56, %s57
      %p71 = scmp.eq.s32.totalorder %s37, 3
      %p72 = por %p70, %p71
      %p74 = scmp.ne.s32.totalorder %s57, %s73
      %p75 = scmp.eq.s32.totalorder %s37, 0
      %p76 = por %p74, %p75
      %s77 = ssub.s32 %s39, %s46
      %p78 = scmp.eq.s32.totalorder %s77, 0
      %s80 = sadd.s32 %s79, 1
      %s81 = scalar_select %p78, %s79, %s80
      %p84 = pneg %p78
      %p85 = scmp.eq.s32.totalorder %s31, 3
      %p86 = por %p84, %p85
      %p87 = scmp.ne.s32.totalorder %s79, %s82
      %p88 = scmp.eq.s32.totalorder %s31, 0
      %p89 = por %p87, %p88
      %p90 = scmp.ne.s32.totalorder %s79, %s82
      %p91 = scmp.eq.s32.totalorder %s36, 3
      %p92 = por %p90, %p91
      %p93 = scmp.ne.s32.totalorder %s82, %s83
      %p94 = scmp.eq.s32.totalorder %s36, 0
      %p95 = por %p93, %p94
      %p96 = scmp.ne.s32.totalorder %s82, %s83
      %p97 = scmp.eq.s32.totalorder %s37, 3
      %p98 = por %p96, %p97
      %p100 = scmp.ne.s32.totalorder %s83, %s99
      %p101 = scmp.eq.s32.totalorder %s37, 0
      %p102 = por %p100, %p101
      %s103 = ssub.s32 %s39, %s46
      %p104 = scmp.eq.s32.totalorder %s103, 0
      %s106 = sadd.s32 %s105, 1
      %s107 = scalar_select %p104, %s105, %s106
      %p110 = pneg %p104
      %p111 = scmp.eq.s32.totalorder %s31, 3
      %p112 = por %p110, %p111
      %p113 = scmp.ne.s32.totalorder %s105, %s108
      %p114 = scmp.eq.s32.totalorder %s31, 0
      %p115 = por %p113, %p114
      %p116 = scmp.ne.s32.totalorder %s105, %s108
      %p117 = scmp.eq.s32.totalorder %s36, 3
      %p118 = por %p116, %p117
      %p119 = scmp.ne.s32.totalorder %s108, %s109
      %p120 = scmp.eq.s32.totalorder %s36, 0
      %p121 = por %p119, %p120
      %p122 = scmp.ne.s32.totalorder %s108, %s109
      %p123 = scmp.eq.s32.totalorder %s37, 3
      %p124 = por %p122, %p123
      %p126 = scmp.ne.s32.totalorder %s109, %s125
      %p127 = scmp.eq.s32.totalorder %s37, 0
      %p128 = por %p126, %p127
      %s129 = ssub.s32 %s39, %s46
      %p130 = scmp.eq.s32.totalorder %s129, 0
      %s132 = sadd.s32 %s131, 1
      %s133 = scalar_select %p130, %s131, %s132
      %p136 = pneg %p130
      %p137 = scmp.eq.s32.totalorder %s31, 3
      %p138 = por %p136, %p137
      %p139 = scmp.ne.s32.totalorder %s131, %s134
      %p140 = scmp.eq.s32.totalorder %s31, 0
      %p141 = por %p139, %p140
      %p142 = scmp.ne.s32.totalorder %s131, %s134
      %p143 = scmp.eq.s32.totalorder %s36, 3
      %p144 = por %p142, %p143
      %p145 = scmp.ne.s32.totalorder %s134, %s135
      %p146 = scmp.eq.s32.totalorder %s36, 0
      %p147 = por %p145, %p146
      %p148 = scmp.ne.s32.totalorder %s134, %s135
      %p149 = scmp.eq.s32.totalorder %s37, 3
      %p150 = por %p148, %p149
      %p152 = scmp.ne.s32.totalorder %s135, %s151
      %p153 = scmp.eq.s32.totalorder %s37, 0
      %p154 = por %p152, %p153
      %s155 = ssub.s32 %s39, %s46
      %p156 = scmp.eq.s32.totalorder %s155, 0
      %s158 = sadd.s32 %s157, 1
      %s159 = scalar_select %p156, %s157, %s158
      %p162 = pneg %p156
      %p163 = scmp.eq.s32.totalorder %s31, 3
      %p164 = por %p162, %p163
      %p165 = scmp.ne.s32.totalorder %s157, %s160
      %p166 = scmp.eq.s32.totalorder %s31, 0
      %p167 = por %p165, %p166
      %p168 = scmp.ne.s32.totalorder %s157, %s160
      %p169 = scmp.eq.s32.totalorder %s36, 3
      %p170 = por %p168, %p169
      %p171 = scmp.ne.s32.totalorder %s160, %s161
      %p172 = scmp.eq.s32.totalorder %s36, 0
      %p173 = por %p171, %p172
      %p174 = scmp.ne.s32.totalorder %s160, %s161
      %p175 = scmp.eq.s32.totalorder %s37, 3
      %p176 = por %p174, %p175
      %p178 = scmp.ne.s32.totalorder %s161, %s177
      %p179 = scmp.eq.s32.totalorder %s37, 0
      %p180 = por %p178, %p179
      %s181 = ssub.s32 %s39, %s46
      %p182 = scmp.eq.s32.totalorder %s181, 0
      %s184 = sadd.s32 %s183, 1
      %s185 = scalar_select %p182, %s183, %s184
      %p188 = pneg %p182
      %p189 = scmp.eq.s32.totalorder %s31, 3
      %p190 = por %p188, %p189
      %p191 = scmp.ne.s32.totalorder %s183, %s186
      %p192 = scmp.eq.s32.totalorder %s31, 0
      %p193 = por %p191, %p192
      %p194 = scmp.ne.s32.totalorder %s183, %s186
      %p195 = scmp.eq.s32.totalorder %s36, 3
      %p196 = por %p194, %p195
      %p197 = scmp.ne.s32.totalorder %s186, %s187
      %p198 = scmp.eq.s32.totalorder %s36, 0
      %p199 = por %p197, %p198
      %p200 = scmp.ne.s32.totalorder %s186, %s187
      %p201 = scmp.eq.s32.totalorder %s37, 3
      %p202 = por %p200, %p201
      %p204 = scmp.ne.s32.totalorder %s187, %s203
      %p205 = scmp.eq.s32.totalorder %s37, 0
      %p206 = por %p204, %p205
      %s207 = ssub.s32 %s39, %s46
      %p208 = scmp.eq.s32.totalorder %s207, 0
      %s210 = sadd.s32 %s209, 1
      %s211 = scalar_select %p208, %s209, %s210
      %p214 = pneg %p208
      %p215 = scmp.eq.s32.totalorder %s31, 3
      %p216 = por %p214, %p215
      %p217 = scmp.ne.s32.totalorder %s209, %s212
      %p218 = scmp.eq.s32.totalorder %s31, 0
      %p219 = por %p217, %p218
      %p220 = scmp.ne.s32.totalorder %s209, %s212
      %p221 = scmp.eq.s32.totalorder %s36, 3
      %p222 = por %p220, %p221
      %p223 = scmp.ne.s32.totalorder %s212, %s213
      %p224 = scmp.eq.s32.totalorder %s36, 0
      %p225 = por %p223, %p224
      %p226 = scmp.ne.s32.totalorder %s212, %s213
      %p227 = scmp.eq.s32.totalorder %s37, 3
      %p228 = por %p226, %p227
      %p230 = scmp.ne.s32.totalorder %s213, %s229
      %p231 = scmp.eq.s32.totalorder %s37, 0
      %p232 = por %p230, %p231
      %s233 = ssub.s32 %s39, %s46
      %p234 = scmp.eq.s32.totalorder %s233, 0
      %s236 = sadd.s32 %s235, 1
      %s237 = scalar_select %p234, %s235, %s236
      %p240 = pneg %p234
      %p241 = scmp.eq.s32.totalorder %s31, 3
      %p242 = por %p240, %p241
      %p243 = scmp.ne.s32.totalorder %s235, %s238
      %p244 = scmp.eq.s32.totalorder %s31, 0
      %p245 = por %p243, %p244
      %p246 = scmp.ne.s32.totalorder %s235, %s238
      %p247 = scmp.eq.s32.totalorder %s36, 3
      %p248 = por %p246, %p247
      %p249 = scmp.ne.s32.totalorder %s238, %s239
      %p250 = scmp.eq.s32.totalorder %s36, 0
      %p251 = por %p249, %p250
      %p252 = scmp.ne.s32.totalorder %s238, %s239
      %p253 = scmp.eq.s32.totalorder %s37, 3
      %p254 = por %p252, %p253
      %p256 = scmp.ne.s32.totalorder %s239, %s255
      %p257 = scmp.eq.s32.totalorder %s37, 0
      %p258 = por %p256, %p257
      %s259 = ssub.s32 %s39, %s46
      %p260 = scmp.eq.s32.totalorder %s259, 0
      %s262 = sadd.s32 %s261, 1
      %s263 = scalar_select %p260, %s261, %s262
      %p266 = pneg %p260
      %p267 = scmp.eq.s32.totalorder %s31, 3
      %p268 = por %p266, %p267
      %p269 = scmp.ne.s32.totalorder %s261, %s264
      %p270 = scmp.eq.s32.totalorder %s31, 0
      %p271 = por %p269, %p270
      %p272 = scmp.ne.s32.totalorder %s261, %s264
      %p273 = scmp.eq.s32.totalorder %s36, 3
      %p274 = por %p272, %p273
      %p275 = scmp.ne.s32.totalorder %s264, %s265
      %p276 = scmp.eq.s32.totalorder %s36, 0
      %p277 = por %p275, %p276
      %p278 = scmp.ne.s32.totalorder %s264, %s265
      %p279 = scmp.eq.s32.totalorder %s37, 3
      %p280 = por %p278, %p279
      %p282 = scmp.ne.s32.totalorder %s265, %s281
      %p283 = scmp.eq.s32.totalorder %s37, 0
      %p284 = por %p282, %p283
      %s285 = ssub.s32 %s39, %s46
      %p286 = scmp.eq.s32.totalorder %s285, 0
      %s288 = sadd.s32 %s287, 1
      %s289 = scalar_select %p286, %s287, %s288
      %p292 = pneg %p286
      %p293 = scmp.eq.s32.totalorder %s31, 3
      %p294 = por %p292, %p293
      %p295 = scmp.ne.s32.totalorder %s287, %s290
      %p296 = scmp.eq.s32.totalorder %s31, 0
      %p297 = por %p295, %p296
      %p298 = scmp.ne.s32.totalorder %s287, %s290
      %p299 = scmp.eq.s32.totalorder %s36, 3
      %p300 = por %p298, %p299
      %p301 = scmp.ne.s32.totalorder %s290, %s291
      %p302 = scmp.eq.s32.totalorder %s36, 0
      %p303 = por %p301, %p302
      %p304 = scmp.ne.s32.totalorder %s290, %s291
      %p305 = scmp.eq.s32.totalorder %s37, 3
      %p306 = por %p304, %p305
      %p308 = scmp.ne.s32.totalorder %s291, %s307
      %p309 = scmp.eq.s32.totalorder %s37, 0
      %p310 = por %p308, %p309
      %s311 = ssub.s32 %s39, %s46
      %p312 = scmp.eq.s32.totalorder %s311, 0
      %s314 = sadd.s32 %s313, 1
      %s315 = scalar_select %p312, %s313, %s314
      %p318 = pneg %p312
      %p319 = scmp.eq.s32.totalorder %s31, 3
      %p320 = por %p318, %p319
      %p321 = scmp.ne.s32.totalorder %s313, %s316
      %p322 = scmp.eq.s32.totalorder %s31, 0
      %p323 = por %p321, %p322
      %p324 = scmp.ne.s32.totalorder %s313, %s316
      %p325 = scmp.eq.s32.totalorder %s36, 3
      %p326 = por %p324, %p325
      %p327 = scmp.ne.s32.totalorder %s316, %s317
      %p328 = scmp.eq.s32.totalorder %s36, 0
      %p329 = por %p327, %p328
      %p330 = scmp.ne.s32.totalorder %s316, %s317
      %p331 = scmp.eq.s32.totalorder %s37, 3
      %p332 = por %p330, %p331
      %p334 = scmp.ne.s32.totalorder %s317, %s333
      %p335 = scmp.eq.s32.totalorder %s37, 0
      %p336 = por %p334, %p335
      %s337 = ssub.s32 %s39, %s46
      %p338 = scmp.eq.s32.totalorder %s337, 0
      %s340 = sadd.s32 %s339, 1
      %s341 = scalar_select %p338, %s339, %s340
      %p344 = pneg %p338
      %p345 = scmp.eq.s32.totalorder %s31, 3
      %p346 = por %p344, %p345
      %p347 = scmp.ne.s32.totalorder %s339, %s342
      %p348 = scmp.eq.s32.totalorder %s31, 0
      %p349 = por %p347, %p348
      %p350 = scmp.ne.s32.totalorder %s339, %s342
      %p351 = scmp.eq.s32.totalorder %s36, 3
      %p352 = por %p350, %p351
      %p353 = scmp.ne.s32.totalorder %s342, %s343
      %p354 = scmp.eq.s32.totalorder %s36, 0
      %p355 = por %p353, %p354
      %p356 = scmp.ne.s32.totalorder %s342, %s343
      %p357 = scmp.eq.s32.totalorder %s37, 3
      %p358 = por %p356, %p357
      %p360 = scmp.ne.s32.totalorder %s343, %s359
      %p361 = scmp.eq.s32.totalorder %s37, 0
      %p362 = por %p360, %p361
      %s363 = ssub.s32 %s39, %s46
      %p364 = scmp.eq.s32.totalorder %s363, 0
      %s366 = sadd.s32 %s365, 1
      %s367 = scalar_select %p364, %s365, %s366
      %p370 = pneg %p364
      %p371 = scmp.eq.s32.totalorder %s31, 3
      %p372 = por %p370, %p371
      %p373 = scmp.ne.s32.totalorder %s365, %s368
      %p374 = scmp.eq.s32.totalorder %s31, 0
      %p375 = por %p373, %p374
      %p376 = scmp.ne.s32.totalorder %s365, %s368
      %p377 = scmp.eq.s32.totalorder %s36, 3
      %p378 = por %p376, %p377
      %p379 = scmp.ne.s32.totalorder %s368, %s369
      %p380 = scmp.eq.s32.totalorder %s36, 0
      %p381 = por %p379, %p380
      %p382 = scmp.ne.s32.totalorder %s368, %s369
      %p383 = scmp.eq.s32.totalorder %s37, 3
      %p384 = por %p382, %p383
      %p386 = scmp.ne.s32.totalorder %s369, %s385
      %p387 = scmp.eq.s32.totalorder %s37, 0
      %p388 = por %p386, %p387
      %s389 = ssub.s32 %s38, %s50
      %p390 = scmp.eq.s32.totalorder %s389, 0
      %s392 = sadd.s32 %s391, 1
      %s393 = scalar_select %p390, %s391, %s392
      %p396 = pneg %p390
      %p397 = scmp.eq.s32.totalorder %s31, 3
      %p398 = por %p396, %p397
      %p399 = scmp.ne.s32.totalorder %s391, %s394
      %p400 = scmp.eq.s32.totalorder %s31, 0
      %p401 = por %p399, %p400
      %p402 = scmp.ne.s32.totalorder %s391, %s394
      %p403 = scmp.eq.s32.totalorder %s36, 3
      %p404 = por %p402, %p403
      %p405 = scmp.ne.s32.totalorder %s394, %s395
      %p406 = scmp.eq.s32.totalorder %s36, 0
      %p407 = por %p405, %p406
      %p408 = scmp.ne.s32.totalorder %s394, %s395
      %p409 = scmp.eq.s32.totalorder %s37, 3
      %p410 = por %p408, %p409
      %p412 = scmp.ne.s32.totalorder %s395, %s411
      %p413 = scmp.eq.s32.totalorder %s37, 0
      %p414 = por %p412, %p413
      %p415 = scmp.le.s32.totalorder 1, %s31
      %p416 = scmp.lt.s32.totalorder %s31, 5
      %p417 = pnand %p415, %p416
      %p418 = pneg %p417
      // Predicated region
      $region9: #{tpu_custom_call.1} parent=5 // pred_check
        _
      $region10: #{tpu_custom_call.1} parent=5 // pred_check_branch
        %420 = sbr.rel (%p417) target = $region12
      $region11: #{tpu_custom_call.1} parent=5 // pred_region
        %s421 = ssub.s32 %s31, 1
      $region12: #{tpu_custom_call.1} parent=5 // pred_fallthru
        _
      %p422 = scmp.lt.s32.totalorder %s31, 4
      // Predicated region
      $region13: #{tpu_custom_call.1} parent=5 // pred_check
        %p423 = pneg %p422
      $region14: #{tpu_custom_call.1} parent=5 // pred_check_branch
        %425 = sbr.rel (%p423) target = $region16
      $region15: #{tpu_custom_call.1} parent=5 // pred_region
        // Predicated region
        $region17: #{tpu_custom_call.1} parent=15 // pred_check
          %p426 = pneg %p63
        $region18: #{tpu_custom_call.1} parent=15 // pred_check_branch
          %428 = sbr.rel (%p426) target = $region20
        $region19: #{tpu_custom_call.1} parent=15 // pred_region
          %s429 = sand.u32 %s53, 1
          %s430 = scalar_lea.sflag [#allocation3], %s429
          %s431 = sand.u32 %s53, 1
          %s432 = smul.addr %s431, 8
          %s433 = scalar_lea.vmem [#allocation2], %s432
          %s435 = ssub.s32 128, 128
          %436 = vsyncadd %s430, %s435
          %s437 = smul.addr %s38, 128
          %s438 = scalar_lea.hbm %s0, %s437
          %s440 = sshll.u32 %s433, 4
          %s441 = int_to_ptr.vmem [resolvable:$true] %s440
          %443 = dma.hbm_to_vmem [thread:$0]  %s438, 128, %s441, %s430
        $region20: #{tpu_custom_call.1} parent=15 // pred_fallthru
          _
        // Predicated region
        $region21: #{tpu_custom_call.1} parent=15 // pred_check
          %p444 = pneg %p89
        $region22: #{tpu_custom_call.1} parent=15 // pred_check_branch
          %446 = sbr.rel (%p444) target = $region24
        $region23: #{tpu_custom_call.1} parent=15 // pred_region
          %p447 = scmp.lt.s32.totalorder %s39, 1
          %s448 = scalar_select %p447, %s39, 1
          %s449 = smul.addr %s448, 4
          %s450 = smul.addr %s449, 4
          %s451 = scalar_lea.vmem %s1, %s450
        $region24: #{tpu_custom_call.1} parent=15 // pred_fallthru
          _
        // Predicated region
        $region25: #{tpu_custom_call.1} parent=15 // pred_check
          %p452 = pneg %p115
        $region26: #{tpu_custom_call.1} parent=15 // pred_check_branch
          %454 = sbr.rel (%p452) target = $region28
        $region27: #{tpu_custom_call.1} parent=15 // pred_region
          %p455 = scmp.lt.s32.totalorder %s39, 1
          %s456 = scalar_select %p455, %s39, 1
          %s457 = scalar_lea.vmem %s2, %s456
        $region28: #{tpu_custom_call.1} parent=15 // pred_fallthru
          _
        // Predicated region
        $region29: #{tpu_custom_call.1} parent=15 // pred_check
          %p458 = pneg %p141
        $region30: #{tpu_custom_call.1} parent=15 // pred_check_branch
          %460 = sbr.rel (%p458) target = $region32
        $region31: #{tpu_custom_call.1} parent=15 // pred_region
          %p461 = scmp.lt.s32.totalorder %s39, 1
          %s462 = scalar_select %p461, %s39, 1
          %s463 = smul.addr %s462, 4
          %s464 = smul.addr %s463, 4
          %s465 = scalar_lea.vmem %s3, %s464
        $region32: #{tpu_custom_call.1} parent=15 // pred_fallthru
          _
        // Predicated region
        $region33: #{tpu_custom_call.1} parent=15 // pred_check
          %p466 = pneg %p167
        $region34: #{tpu_custom_call.1} parent=15 // pred_check_branch
          %468 = sbr.rel (%p466) target = $region36
        $region35: #{tpu_custom_call.1} parent=15 // pred_region
          %s469 = sand.u32 %s31, 1
          %s470 = scalar_lea.sflag [#allocation6], %s469
          %s471 = sand.u32 %s157, 1
          %s472 = scalar_lea.vmem [#allocation5], %s471
          %s474 = ssub.s32 16, 16
          %475 = vsyncadd %s470, %s474
          %s476 = smul.addr %s39, 16
          %s477 = scalar_lea.hbm %s4, %s476
          %s479 = sshll.u32 %s472, 4
          %s480 = int_to_ptr.vmem [resolvable:$true] %s479
          %482 = dma.hbm_to_vmem [thread:$0]  %s477, 16, %s480, %s470
        $region36: #{tpu_custom_call.1} parent=15 // pred_fallthru
          _
        // Predicated region
        $region37: #{tpu_custom_call.1} parent=15 // pred_check
          %p483 = pneg %p193
        $region38: #{tpu_custom_call.1} parent=15 // pred_check_branch
          %485 = sbr.rel (%p483) target = $region40
        $region39: #{tpu_custom_call.1} parent=15 // pred_region
          %s486 = sand.u32 %s31, 1
          %s487 = scalar_lea.sflag [#allocation6], %s486
          %s488 = sand.u32 %s183, 1
          %s489 = scalar_lea.vmem [#allocation7], %s488
          %s491 = ssub.s32 16, 16
          %492 = vsyncadd %s487, %s491
          %s493 = smul.addr %s39, 16
          %s494 = scalar_lea.hbm %s5, %s493
          %s496 = sshll.u32 %s489, 4
          %s497 = int_to_ptr.vmem [resolvable:$true] %s496
          %499 = dma.hbm_to_vmem [thread:$0]  %s494, 16, %s497, %s487
        $region40: #{tpu_custom_call.1} parent=15 // pred_fallthru
          _
        // Predicated region
        $region41: #{tpu_custom_call.1} parent=15 // pred_check
          %p500 = pneg %p219
        $region42: #{tpu_custom_call.1} parent=15 // pred_check_branch
          %502 = sbr.rel (%p500) target = $region44
        $region43: #{tpu_custom_call.1} parent=15 // pred_region
          %s503 = sand.u32 %s31, 1
          %s504 = scalar_lea.sflag [#allocation9], %s503
          %s505 = sand.u32 %s209, 1
          %s506 = scalar_lea.vmem [#allocation8], %s505
          %s508 = ssub.s32 16, 16
          %509 = vsyncadd %s504, %s508
          %s510 = smul.addr %s39, 16
          %s511 = scalar_lea.hbm %s6, %s510
          %s513 = sshll.u32 %s506, 4
          %s514 = int_to_ptr.vmem [resolvable:$true] %s513
          %516 = dma.hbm_to_vmem [thread:$0]  %s511, 16, %s514, %s504
        $region44: #{tpu_custom_call.1} parent=15 // pred_fallthru
          _
        // Predicated region
        $region45: #{tpu_custom_call.1} parent=15 // pred_check
          %p517 = pneg %p245
        $region46: #{tpu_custom_call.1} parent=15 // pred_check_branch
          %519 = sbr.rel (%p517) target = $region48
        $region47: #{tpu_custom_call.1} parent=15 // pred_region
          %p520 = scmp.lt.s32.totalorder %s39, 1
          %s521 = scalar_select %p520, %s39, 1
          %s522 = smul.addr %s521, 4
          %s523 = smul.addr %s522, 4
          %s524 = scalar_lea.vmem %s7, %s523
        $region48: #{tpu_custom_call.1} parent=15 // pred_fallthru
          _
        // Predicated region
        $region49: #{tpu_custom_call.1} parent=15 // pred_check
          %p525 = pneg %p271
        $region50: #{tpu_custom_call.1} parent=15 // pred_check_branch
          %527 = sbr.rel (%p525) target = $region52
        $region51: #{tpu_custom_call.1} parent=15 // pred_region
          %s528 = sand.u32 %s31, 1
          %s529 = scalar_lea.sflag [#allocation9], %s528
          %s530 = sand.u32 %s261, 1
          %s531 = scalar_lea.vmem [#allocation10], %s530
          %s533 = ssub.s32 16, 16
          %534 = vsyncadd %s529, %s533
          %s535 = smul.addr %s39, 16
          %s536 = scalar_lea.hbm %s8, %s535
          %s538 = sshll.u32 %s531, 4
          %s539 = int_to_ptr.vmem [resolvable:$true] %s538
          %541 = dma.hbm_to_vmem [thread:$0]  %s536, 16, %s539, %s529
        $region52: #{tpu_custom_call.1} parent=15 // pred_fallthru
          _
        // Predicated region
        $region53: #{tpu_custom_call.1} parent=15 // pred_check
          %p542 = pneg %p297
        $region54: #{tpu_custom_call.1} parent=15 // pred_check_branch
          %544 = sbr.rel (%p542) target = $region56
        $region55: #{tpu_custom_call.1} parent=15 // pred_region
          %p545 = scmp.lt.s32.totalorder %s39, 1
          %s546 = scalar_select %p545, %s39, 1
          %s547 = smul.addr %s546, 8
          %s548 = smul.addr %s547, 4
          %s549 = scalar_lea.vmem %s9, %s548
        $region56: #{tpu_custom_call.1} parent=15 // pred_fallthru
          _
        // Predicated region
        $region57: #{tpu_custom_call.1} parent=15 // pred_check
          %p550 = pneg %p323
        $region58: #{tpu_custom_call.1} parent=15 // pred_check_branch
          %552 = sbr.rel (%p550) target = $region60
        $region59: #{tpu_custom_call.1} parent=15 // pred_region
          %p553 = scmp.lt.s32.totalorder %s39, 1
          %s554 = scalar_select %p553, %s39, 1
          %s555 = scalar_lea.vmem %s10, %s554
        $region60: #{tpu_custom_call.1} parent=15 // pred_fallthru
          _
        // Predicated region
        $region61: #{tpu_custom_call.1} parent=15 // pred_check
          %p556 = pneg %p349
        $region62: #{tpu_custom_call.1} parent=15 // pred_check_branch
          %558 = sbr.rel (%p556) target = $region64
        $region63: #{tpu_custom_call.1} parent=15 // pred_region
          %p559 = scmp.lt.s32.totalorder %s39, 1
          %s560 = scalar_select %p559, %s39, 1
          %s561 = scalar_lea.vmem %s11, %s560
        $region64: #{tpu_custom_call.1} parent=15 // pred_fallthru
          _
        // Predicated region
        $region65: #{tpu_custom_call.1} parent=15 // pred_check
          %p562 = pneg %p375
        $region66: #{tpu_custom_call.1} parent=15 // pred_check_branch
          %564 = sbr.rel (%p562) target = $region68
        $region67: #{tpu_custom_call.1} parent=15 // pred_region
          %p565 = scmp.lt.s32.totalorder %s39, 1
          %s566 = scalar_select %p565, %s39, 1
          %s567 = scalar_lea.vmem %s12, %s566
        $region68: #{tpu_custom_call.1} parent=15 // pred_fallthru
          _
      $region16: #{tpu_custom_call.1} parent=5 // pred_fallthru
        _
      %p568 = scmp.le.s32.totalorder 1, %s31
      %p569 = scmp.lt.s32.totalorder %s31, 5
      %p570 = pnand %p568, %p569
      %p571 = pneg %p570
      // Predicated region
      $region69: #{tpu_custom_call.1} parent=5 // pred_check
        _
      $region70: #{tpu_custom_call.1} parent=5 // pred_check_branch
        %573 = sbr.rel (%p570) target = $region72
      $region71: #{tpu_custom_call.1} parent=5 // pred_region
        %s574 = ssub.s32 %s31, 1
        %s575 = sand.u32 %s56, 1
        %s576 = scalar_lea.sflag [#allocation3], %s575
        %s577 = sand.u32 %s56, 1
        %s578 = smul.addr %s577, 8
        %s579 = scalar_lea.vmem [#allocation2], %s578
        // Predicated region
        $region73: #{tpu_custom_call.1} parent=71 // pred_check
          %p580 = pneg %p69
        $region74: #{tpu_custom_call.1} parent=71 // pred_check_branch
          %582 = sbr.rel (%p580) target = $region76
        $region75: #{tpu_custom_call.1} parent=71 // pred_region
          %583 = dma.done %s576, 128
        $region76: #{tpu_custom_call.1} parent=71 // pred_fallthru
          _
        %s584 = sand.u32 %s36, 1
        %s585 = scalar_lea.sflag [#allocation6], %s584
        %s586 = sand.u32 %s160, 1
        %s587 = scalar_lea.vmem [#allocation5], %s586
        // Predicated region
        $region77: #{tpu_custom_call.1} parent=71 // pred_check
          %p588 = pneg %p173
        $region78: #{tpu_custom_call.1} parent=71 // pred_check_branch
          %590 = sbr.rel (%p588) target = $region80
        $region79: #{tpu_custom_call.1} parent=71 // pred_region
          %591 = dma.done %s585, 16
        $region80: #{tpu_custom_call.1} parent=71 // pred_fallthru
          _
        %s592 = sand.u32 %s36, 1
        %s593 = scalar_lea.sflag [#allocation6], %s592
        %s594 = sand.u32 %s186, 1
        %s595 = scalar_lea.vmem [#allocation7], %s594
        // Predicated region
        $region81: #{tpu_custom_call.1} parent=71 // pred_check
          %p596 = pneg %p199
        $region82: #{tpu_custom_call.1} parent=71 // pred_check_branch
          %598 = sbr.rel (%p596) target = $region84
        $region83: #{tpu_custom_call.1} parent=71 // pred_region
          %599 = dma.done %s593, 16
        $region84: #{tpu_custom_call.1} parent=71 // pred_fallthru
          _
        %s600 = sand.u32 %s36, 1
        %s601 = scalar_lea.sflag [#allocation9], %s600
        %s602 = sand.u32 %s212, 1
        %s603 = scalar_lea.vmem [#allocation8], %s602
        // Predicated region
        $region85: #{tpu_custom_call.1} parent=71 // pred_check
          %p604 = pneg %p225
        $region86: #{tpu_custom_call.1} parent=71 // pred_check_branch
          %606 = sbr.rel (%p604) target = $region88
        $region87: #{tpu_custom_call.1} parent=71 // pred_region
          %607 = dma.done %s601, 16
        $region88: #{tpu_custom_call.1} parent=71 // pred_fallthru
          _
        %s608 = sand.u32 %s36, 1
        %s609 = scalar_lea.sflag [#allocation9], %s608
        %s610 = sand.u32 %s264, 1
        %s611 = scalar_lea.vmem [#allocation10], %s610
        // Predicated region
        $region89: #{tpu_custom_call.1} parent=71 // pred_check
          %p612 = pneg %p277
        $region90: #{tpu_custom_call.1} parent=71 // pred_check_branch
          %614 = sbr.rel (%p612) target = $region92
        $region91: #{tpu_custom_call.1} parent=71 // pred_region
          %615 = dma.done %s609, 16
        $region92: #{tpu_custom_call.1} parent=71 // pred_fallthru
          _
        %s616 = sand.u32 %s56, 1
        %s617 = scalar_lea.sflag [#allocation3], %s616
        %s618 = sand.u32 %s56, 1
        %s619 = smul.addr %s618, 8
        %s620 = scalar_lea.vmem [#allocation2], %s619
        %p621 = pneg %p69
        %p622 = pneg %p66
        %p623 = scmp.lt.s32.totalorder %s41, 1
        %s624 = scalar_select %p623, %s41, 1
        %s625 = smul.addr %s624, 4
        %s626 = smul.addr %s625, 4
        %s627 = scalar_lea.vmem %s1, %s626
        %p628 = pneg %p95
        %p629 = pneg %p92
        %p630 = scmp.lt.s32.totalorder %s41, 1
        %s631 = scalar_select %p630, %s41, 1
        %s632 = scalar_lea.vmem %s2, %s631
        %p633 = pneg %p121
        %p634 = pneg %p118
        %p635 = scmp.lt.s32.totalorder %s41, 1
        %s636 = scalar_select %p635, %s41, 1
        %s637 = smul.addr %s636, 4
        %s638 = smul.addr %s637, 4
        %s639 = scalar_lea.vmem %s3, %s638
        %p640 = pneg %p147
        %p641 = pneg %p144
        %s642 = sand.u32 %s36, 1
        %s643 = scalar_lea.sflag [#allocation6], %s642
        %s644 = sand.u32 %s160, 1
        %s645 = scalar_lea.vmem [#allocation5], %s644
        %p646 = pneg %p173
        %p647 = pneg %p170
        %s648 = sand.u32 %s36, 1
        %s649 = scalar_lea.sflag [#allocation6], %s648
        %s650 = sand.u32 %s186, 1
        %s651 = scalar_lea.vmem [#allocation7], %s650
        %p652 = pneg %p199
        %p653 = pneg %p196
        %s654 = sand.u32 %s36, 1
        %s655 = scalar_lea.sflag [#allocation9], %s654
        %s656 = sand.u32 %s212, 1
        %s657 = scalar_lea.vmem [#allocation8], %s656
        %p658 = pneg %p225
        %p659 = pneg %p222
        %p660 = scmp.lt.s32.totalorder %s41, 1
        %s661 = scalar_select %p660, %s41, 1
        %s662 = smul.addr %s661, 4
        %s663 = smul.addr %s662, 4
        %s664 = scalar_lea.vmem %s7, %s663
        %p665 = pneg %p251
        %p666 = pneg %p248
        %s667 = sand.u32 %s36, 1
        %s668 = scalar_lea.sflag [#allocation9], %s667
        %s669 = sand.u32 %s264, 1
        %s670 = scalar_lea.vmem [#allocation10], %s669
        %p671 = pneg %p277
        %p672 = pneg %p274
        %p673 = scmp.lt.s32.totalorder %s41, 1
        %s674 = scalar_select %p673, %s41, 1
        %s675 = smul.addr %s674, 8
        %s676 = smul.addr %s675, 4
        %s677 = scalar_lea.vmem %s9, %s676
        %p678 = pneg %p303
        %p679 = pneg %p300
        %p680 = scmp.lt.s32.totalorder %s41, 1
        %s681 = scalar_select %p680, %s41, 1
        %s682 = scalar_lea.vmem %s10, %s681
        %p683 = pneg %p329
        %p684 = pneg %p326
        %p685 = scmp.lt.s32.totalorder %s41, 1
        %s686 = scalar_select %p685, %s41, 1
        %s687 = scalar_lea.vmem %s11, %s686
        %p688 = pneg %p355
        %p689 = pneg %p352
        %p690 = scmp.lt.s32.totalorder %s41, 1
        %s691 = scalar_select %p690, %s41, 1
        %s692 = scalar_lea.vmem %s12, %s691
        %p693 = pneg %p381
        %p694 = pneg %p378
        %p695 = pneg %p407
        %p696 = pneg %p404
        %s697 = sand.u32 %s394, 1
        %s698 = scalar_lea.sflag [#allocation4], %s697
        %s699 = sand.u32 %s394, 1
        %s700 = smul.addr %s699, 8
        %s701 = scalar_lea.vmem [#allocation11], %s700
        %p702 = scmp.lt.s32.totalorder %s41, 1
        %s703 = scalar_select %p702, %s41, 1
        %s704 = smul.addr %s703, 4
        %s705 = smul.addr %s704, 4
        %s706 = scalar_lea.vmem %s1, %s705
        %p707 = scmp.lt.s32.totalorder %s41, 1
        %s708 = scalar_select %p707, %s41, 1
        %s709 = scalar_lea.vmem %s2, %s708
        %p710 = scmp.lt.s32.totalorder %s41, 1
        %s711 = scalar_select %p710, %s41, 1
        %s712 = smul.addr %s711, 4
        %s713 = smul.addr %s712, 4
        %s714 = scalar_lea.vmem %s3, %s713
        %p715 = scmp.lt.s32.totalorder %s41, 1
        %s716 = scalar_select %p715, %s41, 1
        %s717 = smul.addr %s716, 4
        %s718 = smul.addr %s717, 4
        %s719 = scalar_lea.vmem %s7, %s718
        %p720 = scmp.lt.s32.totalorder %s41, 1
        %s721 = scalar_select %p720, %s41, 1
        %s722 = smul.addr %s721, 8
        %s723 = smul.addr %s722, 4
        %s724 = scalar_lea.vmem %s9, %s723
        %p725 = scmp.lt.s32.totalorder %s41, 1
        %s726 = scalar_select %p725, %s41, 1
        %s727 = scalar_lea.vmem %s10, %s726
        %p728 = scmp.lt.s32.totalorder %s41, 1
        %s729 = scalar_select %p728, %s41, 1
        %s730 = scalar_lea.vmem %s11, %s729
        %p731 = scmp.lt.s32.totalorder %s41, 1
        %s732 = scalar_select %p731, %s41, 1
        %s733 = scalar_lea.vmem %s12, %s732
        %p735 = scmp.eq.s32.totalorder %s41, 0
        // Predicated region
        $region93: #{tpu_custom_call.1} parent=71 // pred_check
          %p736 = pneg %p735
        $region94: #{tpu_custom_call.1} parent=71 // pred_check_branch
          %738 = sbr.rel (%p736) target = $region96
        $region95: #{tpu_custom_call.1} parent=71 // pred_region
          %v739 = vld [vmem:[%s579] sm:$0xff]
          %vm740 = vcmask 261120
          %741 = vst.msk [vmem:[%s701] sm:$0xff] %vm740, %v739
        $region96: #{tpu_custom_call.1} parent=71 // pred_fallthru
          _
        %v742 = vld [vmem:[%s701] sm:$0xff]
        %v743 = vpack.c.bf16 %v742, %v742
        %v744 = vld [vmem:[%s706] sm:$0xf]
        %v745 = vld [vmem:[%s706 + $0x4] sm:$0xf]
        %v746 = vld [vmem:[%s706 + $0x8] sm:$0xf]
        %v747 = vld [vmem:[%s706 + $0xc] sm:$0xf]
        %v748 = vld [vmem:[%s709] sm:$0x1]
        %v750 = vlaneseq
        %v751 = vshrl.u32 %v750, 7
        %v752 = vsub.s32 0, %v751
        %v753 = vrot.slane %v748, %v752
        %v759 = vunpack.c.l.b16 %v744
        %v760 = vunpack.c.l.b16 %v745
        %v761 = vunpack.c.l.b16 %v746
        %v762 = vunpack.c.l.b16 %v747
        %v763 = vpack.c.b16 %v760, %v759
        %v764 = vpack.c.b16 %v762, %v761
        %vm767 = vcmask 261120
        %v769 = vsel %vm767, %v743, 0
        %771 = vmatprep.subr.bf16.mxu0 0
        %772 = vmatpush1.bf16.msra.mxu0 %v763
        %773 = vmatprep.subr.bf16.mxu0 0
        %774 = vmatpush1.bf16.msra.mxu0 %v764
        %775 = vmatprep.subr.bf16.mxu0 0
        %776 = vmatpush1.bf16.msra.mxu0 0
        %777 = vmatprep.subr.bf16.mxu0 0
        %778 = vmatpush1.bf16.msra.mxu0 0
        %779 = vmatprep.subr.bf16.mxu0 0
        %780 = vmatpush1.bf16.msra.mxu0 0
        %781 = vmatprep.subr.bf16.mxu0 0
        %782 = vmatpush1.bf16.msra.mxu0 0
        %783 = vmatprep.subr.bf16.mxu0 0
        %784 = vmatpush1.bf16.msra.mxu0 0
        %785 = vmatprep.subr.bf16.mxu0 0
        %786 = vmatpush1.bf16.msra.mxu0 0
        %787 = vmatprep.subr.bf16.mxu0 0
        %788 = vmatpush1.bf16.msra.mxu0 0
        %789 = vmatprep.subr.bf16.mxu0 0
        %790 = vmatpush1.bf16.msra.mxu0 0
        %791 = vmatprep.subr.bf16.mxu0 0
        %792 = vmatpush1.bf16.msra.mxu0 0
        %793 = vmatprep.subr.bf16.mxu0 0
        %794 = vmatpush1.bf16.msra.mxu0 0
        %795 = vmatprep.subr.bf16.mxu0 0
        %796 = vmatpush1.bf16.msra.mxu0 0
        %797 = vmatprep.subr.bf16.mxu0 0
        %798 = vmatpush1.bf16.msra.mxu0 0
        %799 = vmatprep.subr.bf16.mxu0 0
        %800 = vmatpush1.bf16.msra.mxu0 0
        %801 = vmatprep.subr.bf16.mxu0 0
        %802 = vmatpush1.bf16.msra.mxu0 0
        %803 = vmatprep.mubr.bf16.mxu0 0
        %804 = vmatmul.mubr.bf16.gmra.mrb[0].mxu0 %v769
        %v805 = vpop.f32.mrb[0].mxu0
        %v806 = vadd.f32 %v753, %v805
        %v807 = vpop.f32.mrb[0].mxu0
        %v808 = vpop.f32.mrb[0].mxu0
        %v809 = vpop.f32.mrb[0].mxu0
        %810 = vdwg.mxu0
        %v811 = vmul.f32 %v806, 0.35355338
        %813 = vrot.lane.b32.xlu0 %v811, 120
        %v814 = vpop.permute.xlu0 %813
        %816 = vrot.lane.b32.xlu0 %v811, 112
        %v817 = vpop.permute.xlu0 %816
        %819 = vrot.lane.b32.xlu0 %v811, 104
        %v820 = vpop.permute.xlu0 %819
        %v822 = vpack.c.bf16 %v811, %v811
        %v823 = vpack.c.bf16 %v814, %v814
        %v824 = vpack.c.bf16 %v817, %v817
        %v825 = vpack.c.bf16 %v820, %v820
        %827 = vrot.lane.b32.xlu0 %v806, 120
        %v828 = vpop.permute.xlu0 %827
        %830 = vrot.lane.b32.xlu0 %v806, 112
        %v831 = vpop.permute.xlu0 %830
        %833 = vrot.lane.b32.xlu0 %v806, 104
        %v834 = vpop.permute.xlu0 %833
        %v836 = vpack.c.bf16 %v806, %v806
        %v837 = vpack.c.bf16 %v828, %v828
        %v838 = vpack.c.bf16 %v831, %v831
        %v839 = vpack.c.bf16 %v834, %v834
        %841 = vrot.lane.b32.xlu0 %v836, 96
        %v842 = vpop.permute.xlu0 %841
        %vm843 = vcmask 64512
        %v845 = vsel %vm843, %v822, 0
        %v848 = vsel %vm843, %v842, 0
        %850 = vmatprep.subr.bf16.mxu0 0
        %851 = vmatpush1.bf16.xpose.msra.mxu0 %v848
        %852 = vmatprep.subr.bf16.mxu0 0
        %853 = vmatpush1.bf16.xpose.msra.mxu0 0
        %854 = vmatprep.subr.bf16.mxu0 0
        %855 = vmatpush1.bf16.xpose.msra.mxu0 0
        %856 = vmatprep.subr.bf16.mxu0 0
        %857 = vmatpush1.bf16.xpose.msra.mxu0 0
        %858 = vmatprep.subr.bf16.mxu0 0
        %859 = vmatpush1.bf16.xpose.msra.mxu0 0
        %860 = vmatprep.subr.bf16.mxu0 0
        %861 = vmatpush1.bf16.xpose.msra.mxu0 0
        %862 = vmatprep.subr.bf16.mxu0 0
        %863 = vmatpush1.bf16.xpose.msra.mxu0 0
        %864 = vmatprep.subr.bf16.mxu0 0
        %865 = vmatpush1.bf16.xpose.msra.mxu0 0
        %866 = vmatprep.subr.bf16.mxu0 0
        %867 = vmatpush1.bf16.xpose.msra.mxu0 0
        %868 = vmatprep.subr.bf16.mxu0 0
        %869 = vmatpush1.bf16.xpose.msra.mxu0 0
        %870 = vmatprep.subr.bf16.mxu0 0
        %871 = vmatpush1.bf16.xpose.msra.mxu0 0
        %872 = vmatprep.subr.bf16.mxu0 0
        %873 = vmatpush1.bf16.xpose.msra.mxu0 0
        %874 = vmatprep.subr.bf16.mxu0 0
        %875 = vmatpush1.bf16.xpose.msra.mxu0 0
        %876 = vmatprep.subr.bf16.mxu0 0
        %877 = vmatpush1.bf16.xpose.msra.mxu0 0
        %878 = vmatprep.subr.bf16.mxu0 0
        %879 = vmatpush1.bf16.xpose.msra.mxu0 0
        %880 = vmatprep.subr.bf16.mxu0 0
        %881 = vmatpush1.bf16.xpose.msra.mxu0 0
        %882 = vmatprep.mubr.bf16.mxu0 0
        %883 = vmatmul.mubr.bf16.gmra.mrb[0].mxu0 %v845
        %v884 = vpop.f32.mrb[0].mxu0
        %v885 = vadd.f32 0.0, %v884
        %v886 = vpop.f32.mrb[0].mxu0
        %v887 = vpop.f32.mrb[0].mxu0
        %v888 = vpop.f32.mrb[0].mxu0
        %889 = vdwg.mxu0
        %891 = vrot.lane.b32.xlu0 %v837, 96
        %v892 = vpop.permute.xlu0 %891
        %v894 = vsel %vm843, %v823, 0
        %v897 = vsel %vm843, %v892, 0
        %899 = vmatprep.subr.bf16.mxu0 0
        %900 = vmatpush1.bf16.xpose.msra.mxu0 %v897
        %901 = vmatprep.subr.bf16.mxu0 0
        %902 = vmatpush1.bf16.xpose.msra.mxu0 0
        %903 = vmatprep.subr.bf16.mxu0 0
        %904 = vmatpush1.bf16.xpose.msra.mxu0 0
        %905 = vmatprep.subr.bf16.mxu0 0
        %906 = vmatpush1.bf16.xpose.msra.mxu0 0
        %907 = vmatprep.subr.bf16.mxu0 0
        %908 = vmatpush1.bf16.xpose.msra.mxu0 0
        %909 = vmatprep.subr.bf16.mxu0 0
        %910 = vmatpush1.bf16.xpose.msra.mxu0 0
        %911 = vmatprep.subr.bf16.mxu0 0
        %912 = vmatpush1.bf16.xpose.msra.mxu0 0
        %913 = vmatprep.subr.bf16.mxu0 0
        %914 = vmatpush1.bf16.xpose.msra.mxu0 0
        %915 = vmatprep.subr.bf16.mxu0 0
        %916 = vmatpush1.bf16.xpose.msra.mxu0 0
        %917 = vmatprep.subr.bf16.mxu0 0
        %918 = vmatpush1.bf16.xpose.msra.mxu0 0
        %919 = vmatprep.subr.bf16.mxu0 0
        %920 = vmatpush1.bf16.xpose.msra.mxu0 0
        %921 = vmatprep.subr.bf16.mxu0 0
        %922 = vmatpush1.bf16.xpose.msra.mxu0 0
        %923 = vmatprep.subr.bf16.mxu0 0
        %924 = vmatpush1.bf16.xpose.msra.mxu0 0
        %925 = vmatprep.subr.bf16.mxu0 0
        %926 = vmatpush1.bf16.xpose.msra.mxu0 0
        %927 = vmatprep.subr.bf16.mxu0 0
        %928 = vmatpush1.bf16.xpose.msra.mxu0 0
        %929 = vmatprep.subr.bf16.mxu0 0
        %930 = vmatpush1.bf16.xpose.msra.mxu0 0
        %931 = vmatprep.mubr.bf16.mxu0 0
        %932 = vmatmul.mubr.bf16.gmra.mrb[0].mxu0 %v894
        %v933 = vpop.f32.mrb[0].mxu0
        %v934 = vadd.f32 0.0, %v933
        %v935 = vpop.f32.mrb[0].mxu0
        %v936 = vpop.f32.mrb[0].mxu0
        %v937 = vpop.f32.mrb[0].mxu0
        %938 = vdwg.mxu0
        %940 = vrot.lane.b32.xlu0 %v838, 96
        %v941 = vpop.permute.xlu0 %940
        %v943 = vsel %vm843, %v824, 0
        %v946 = vsel %vm843, %v941, 0
        %948 = vmatprep.subr.bf16.mxu0 0
        %949 = vmatpush1.bf16.xpose.msra.mxu0 %v946
        %950 = vmatprep.subr.bf16.mxu0 0
        %951 = vmatpush1.bf16.xpose.msra.mxu0 0
        %952 = vmatprep.subr.bf16.mxu0 0
        %953 = vmatpush1.bf16.xpose.msra.mxu0 0
        %954 = vmatprep.subr.bf16.mxu0 0
        %955 = vmatpush1.bf16.xpose.msra.mxu0 0
        %956 = vmatprep.subr.bf16.mxu0 0
        %957 = vmatpush1.bf16.xpose.msra.mxu0 0
        %958 = vmatprep.subr.bf16.mxu0 0
        %959 = vmatpush1.bf16.xpose.msra.mxu0 0
        %960 = vmatprep.subr.bf16.mxu0 0
        %961 = vmatpush1.bf16.xpose.msra.mxu0 0
        %962 = vmatprep.subr.bf16.mxu0 0
        %963 = vmatpush1.bf16.xpose.msra.mxu0 0
        %964 = vmatprep.subr.bf16.mxu0 0
        %965 = vmatpush1.bf16.xpose.msra.mxu0 0
        %966 = vmatprep.subr.bf16.mxu0 0
        %967 = vmatpush1.bf16.xpose.msra.mxu0 0
        %968 = vmatprep.subr.bf16.mxu0 0
        %969 = vmatpush1.bf16.xpose.msra.mxu0 0
        %970 = vmatprep.subr.bf16.mxu0 0
        %971 = vmatpush1.bf16.xpose.msra.mxu0 0
        %972 = vmatprep.subr.bf16.mxu0 0
        %973 = vmatpush1.bf16.xpose.msra.mxu0 0
        %974 = vmatprep.subr.bf16.mxu0 0
        %975 = vmatpush1.bf16.xpose.msra.mxu0 0
        %976 = vmatprep.subr.bf16.mxu0 0
        %977 = vmatpush1.bf16.xpose.msra.mxu0 0
        %978 = vmatprep.subr.bf16.mxu0 0
        %979 = vmatpush1.bf16.xpose.msra.mxu0 0
        %980 = vmatprep.mubr.bf16.mxu0 0
        %981 = vmatmul.mubr.bf16.gmra.mrb[0].mxu0 %v943
        %v982 = vpop.f32.mrb[0].mxu0
        %v983 = vadd.f32 0.0, %v982
        %v984 = vpop.f32.mrb[0].mxu0
        %v985 = vpop.f32.mrb[0].mxu0
        %v986 = vpop.f32.mrb[0].mxu0
        %987 = vdwg.mxu0
        %989 = vrot.lane.b32.xlu0 %v839, 96
        %v990 = vpop.permute.xlu0 %989
        %v992 = vsel %vm843, %v825, 0
        %v995 = vsel %vm843, %v990, 0
        %997 = vmatprep.subr.bf16.mxu0 0
        %998 = vmatpush1.bf16.xpose.msra.mxu0 %v995
        %999 = vmatprep.subr.bf16.mxu0 0
        %1000 = vmatpush1.bf16.xpose.msra.mxu0 0
        %1001 = vmatprep.subr.bf16.mxu0 0
        %1002 = vmatpush1.bf16.xpose.msra.mxu0 0
        %1003 = vmatprep.subr.bf16.mxu0 0
        %1004 = vmatpush1.bf16.xpose.msra.mxu0 0
        %1005 = vmatprep.subr.bf16.mxu0 0
        %1006 = vmatpush1.bf16.xpose.msra.mxu0 0
        %1007 = vmatprep.subr.bf16.mxu0 0
        %1008 = vmatpush1.bf16.xpose.msra.mxu0 0
        %1009 = vmatprep.subr.bf16.mxu0 0
        %1010 = vmatpush1.bf16.xpose.msra.mxu0 0
        %1011 = vmatprep.subr.bf16.mxu0 0
        %1012 = vmatpush1.bf16.xpose.msra.mxu0 0
        %1013 = vmatprep.subr.bf16.mxu0 0
        %1014 = vmatpush1.bf16.xpose.msra.mxu0 0
        %1015 = vmatprep.subr.bf16.mxu0 0
        %1016 = vmatpush1.bf16.xpose.msra.mxu0 0
        %1017 = vmatprep.subr.bf16.mxu0 0
        %1018 = vmatpush1.bf16.xpose.msra.mxu0 0
        %1019 = vmatprep.subr.bf16.mxu0 0
        %1020 = vmatpush1.bf16.xpose.msra.mxu0 0
        %1021 = vmatprep.subr.bf16.mxu0 0
        %1022 = vmatpush1.bf16.xpose.msra.mxu0 0
        %1023 = vmatprep.subr.bf16.mxu0 0
        %1024 = vmatpush1.bf16.xpose.msra.mxu0 0
        %1025 = vmatprep.subr.bf16.mxu0 0
        %1026 = vmatpush1.bf16.xpose.msra.mxu0 0
        %1027 = vmatprep.subr.bf16.mxu0 0
        %1028 = vmatpush1.bf16.xpose.msra.mxu0 0
        %1029 = vmatprep.mubr.bf16.mxu0 0
        %1030 = vmatmul.mubr.bf16.gmra.mrb[0].mxu0 %v992
        %v1031 = vpop.f32.mrb[0].mxu0
        %v1032 = vadd.f32 0.0, %v1031
        %v1033 = vpop.f32.mrb[0].mxu0
        %v1034 = vpop.f32.mrb[0].mxu0
        %v1035 = vpop.f32.mrb[0].mxu0
        %1036 = vdwg.mxu0
        %v1037 = vsel %vm843, %v885, -inf
        %1038 = vmax.xlane.f32.xlu0 %v1037
        %v1039 = vpop.xlane.xlu0 %1038
        %v1040 = vsel %vm843, %v934, -inf
        %1041 = vmax.xlane.f32.xlu0 %v1040
        %v1042 = vpop.xlane.xlu0 %1041
        %v1043 = vsel %vm843, %v983, -inf
        %1044 = vmax.xlane.f32.xlu0 %v1043
        %v1045 = vpop.xlane.xlu0 %1044
        %v1046 = vsel %vm843, %v1032, -inf
        %1047 = vmax.xlane.f32.xlu0 %v1046
        %v1048 = vpop.xlane.xlu0 %1047
        %v1049 = vsub.f32 %v885, %v1039
        %v1050 = vsub.f32 %v934, %v1042
        %v1051 = vsub.f32 %v983, %v1045
        %v1052 = vsub.f32 %v1032, %v1048
        %v1053 = vmul.f32 %v1049, 1.442695
        %v1054 = vpow.pop %v1053
        %v1055 = vmul.f32 %v1050, 1.442695
        %v1056 = vpow.pop %v1055
        %v1057 = vmul.f32 %v1051, 1.442695
        %v1058 = vpow.pop %v1057
        %v1059 = vmul.f32 %v1052, 1.442695
        %v1060 = vpow.pop %v1059
        %v1061 = vsel %vm843, %v1054, 0.0
        %1062 = vadd.xlane.f32.xlu0 %v1061
        %v1063 = vpop.xlane.xlu0 %1062
        %v1064 = vsel %vm843, %v1056, 0.0
        %1065 = vadd.xlane.f32.xlu0 %v1064
        %v1066 = vpop.xlane.xlu0 %1065
        %v1067 = vsel %vm843, %v1058, 0.0
        %1068 = vadd.xlane.f32.xlu0 %v1067
        %v1069 = vpop.xlane.xlu0 %1068
        %v1070 = vsel %vm843, %v1060, 0.0
        %1071 = vadd.xlane.f32.xlu0 %v1070
        %v1072 = vpop.xlane.xlu0 %1071
        %v1073 = vpack.c.bf16 %v1054, %v1054
        %v1074 = vpack.c.bf16 %v1056, %v1056
        %v1075 = vpack.c.bf16 %v1058, %v1058
        %v1076 = vpack.c.bf16 %v1060, %v1060
        %1077 = vrot.lane.b32.xlu0 %v836, 64
        %v1078 = vpop.permute.xlu0 %1077
        %v1080 = vsel %vm843, %v1073, 0
        %vm1082 = vcmask 1043456
        %v1084 = vsel %vm1082, %v1078, 0
        %1086 = vmatprep.subr.bf16.mxu0 0
        %1087 = vmatpush1.bf16.msra.mxu0 %v1084
        %1088 = vmatprep.subr.bf16.mxu0 0
        %1089 = vmatpush1.bf16.msra.mxu0 0
        %1090 = vmatprep.subr.bf16.mxu0 0
        %1091 = vmatpush1.bf16.msra.mxu0 0
        %1092 = vmatprep.subr.bf16.mxu0 0
        %1093 = vmatpush1.bf16.msra.mxu0 0
        %1094 = vmatprep.subr.bf16.mxu0 0
        %1095 = vmatpush1.bf16.msra.mxu0 0
        %1096 = vmatprep.subr.bf16.mxu0 0
        %1097 = vmatpush1.bf16.msra.mxu0 0
        %1098 = vmatprep.subr.bf16.mxu0 0
        %1099 = vmatpush1.bf16.msra.mxu0 0
        %1100 = vmatprep.subr.bf16.mxu0 0
        %1101 = vmatpush1.bf16.msra.mxu0 0
        %1102 = vmatprep.subr.bf16.mxu0 0
        %1103 = vmatpush1.bf16.msra.mxu0 0
        %1104 = vmatprep.subr.bf16.mxu0 0
        %1105 = vmatpush1.bf16.msra.mxu0 0
        %1106 = vmatprep.subr.bf16.mxu0 0
        %1107 = vmatpush1.bf16.msra.mxu0 0
        %1108 = vmatprep.subr.bf16.mxu0 0
        %1109 = vmatpush1.bf16.msra.mxu0 0
        %1110 = vmatprep.subr.bf16.mxu0 0
        %1111 = vmatpush1.bf16.msra.mxu0 0
        %1112 = vmatprep.subr.bf16.mxu0 0
        %1113 = vmatpush1.bf16.msra.mxu0 0
        %1114 = vmatprep.subr.bf16.mxu0 0
        %1115 = vmatpush1.bf16.msra.mxu0 0
        %1116 = vmatprep.subr.bf16.mxu0 0
        %1117 = vmatpush1.bf16.msra.mxu0 0
        %1118 = vmatprep.mubr.bf16.mxu0 0
        %1119 = vmatmul.mubr.bf16.gmra.mrb[0].mxu0 %v1080
        %v1120 = vpop.f32.mrb[0].mxu0
        %v1121 = vadd.f32 0.0, %v1120
        %v1122 = vpop.f32.mrb[0].mxu0
        %v1123 = vpop.f32.mrb[0].mxu0
        %v1124 = vpop.f32.mrb[0].mxu0
        %1125 = vdwg.mxu0
        %1126 = vrot.lane.b32.xlu0 %v837, 64
        %v1127 = vpop.permute.xlu0 %1126
        %v1129 = vsel %vm843, %v1074, 0
        %v1132 = vsel %vm1082, %v1127, 0
        %1134 = vmatprep.subr.bf16.mxu0 0
        %1135 = vmatpush1.bf16.msra.mxu0 %v1132
        %1136 = vmatprep.subr.bf16.mxu0 0
        %1137 = vmatpush1.bf16.msra.mxu0 0
        %1138 = vmatprep.subr.bf16.mxu0 0
        %1139 = vmatpush1.bf16.msra.mxu0 0
        %1140 = vmatprep.subr.bf16.mxu0 0
        %1141 = vmatpush1.bf16.msra.mxu0 0
        %1142 = vmatprep.subr.bf16.mxu0 0
        %1143 = vmatpush1.bf16.msra.mxu0 0
        %1144 = vmatprep.subr.bf16.mxu0 0
        %1145 = vmatpush1.bf16.msra.mxu0 0
        %1146 = vmatprep.subr.bf16.mxu0 0
        %1147 = vmatpush1.bf16.msra.mxu0 0
        %1148 = vmatprep.subr.bf16.mxu0 0
        %1149 = vmatpush1.bf16.msra.mxu0 0
        %1150 = vmatprep.subr.bf16.mxu0 0
        %1151 = vmatpush1.bf16.msra.mxu0 0
        %1152 = vmatprep.subr.bf16.mxu0 0
        %1153 = vmatpush1.bf16.msra.mxu0 0
        %1154 = vmatprep.subr.bf16.mxu0 0
        %1155 = vmatpush1.bf16.msra.mxu0 0
        %1156 = vmatprep.subr.bf16.mxu0 0
        %1157 = vmatpush1.bf16.msra.mxu0 0
        %1158 = vmatprep.subr.bf16.mxu0 0
        %1159 = vmatpush1.bf16.msra.mxu0 0
        %1160 = vmatprep.subr.bf16.mxu0 0
        %1161 = vmatpush1.bf16.msra.mxu0 0
        %1162 = vmatprep.subr.bf16.mxu0 0
        %1163 = vmatpush1.bf16.msra.mxu0 0
        %1164 = vmatprep.subr.bf16.mxu0 0
        %1165 = vmatpush1.bf16.msra.mxu0 0
        %1166 = vmatprep.mubr.bf16.mxu0 0
        %1167 = vmatmul.mubr.bf16.gmra.mrb[0].mxu0 %v1129
        %v1168 = vpop.f32.mrb[0].mxu0
        %v1169 = vadd.f32 0.0, %v1168
        %v1170 = vpop.f32.mrb[0].mxu0
        %v1171 = vpop.f32.mrb[0].mxu0
        %v1172 = vpop.f32.mrb[0].mxu0
        %1173 = vdwg.mxu0
        %1174 = vrot.lane.b32.xlu0 %v838, 64
        %v1175 = vpop.permute.xlu0 %1174
        %v1177 = vsel %vm843, %v1075, 0
        %v1180 = vsel %vm1082, %v1175, 0
        %1182 = vmatprep.subr.bf16.mxu0 0
        %1183 = vmatpush1.bf16.msra.mxu0 %v1180
        %1184 = vmatprep.subr.bf16.mxu0 0
        %1185 = vmatpush1.bf16.msra.mxu0 0
        %1186 = vmatprep.subr.bf16.mxu0 0
        %1187 = vmatpush1.bf16.msra.mxu0 0
        %1188 = vmatprep.subr.bf16.mxu0 0
        %1189 = vmatpush1.bf16.msra.mxu0 0
        %1190 = vmatprep.subr.bf16.mxu0 0
        %1191 = vmatpush1.bf16.msra.mxu0 0
        %1192 = vmatprep.subr.bf16.mxu0 0
        %1193 = vmatpush1.bf16.msra.mxu0 0
        %1194 = vmatprep.subr.bf16.mxu0 0
        %1195 = vmatpush1.bf16.msra.mxu0 0
        %1196 = vmatprep.subr.bf16.mxu0 0
        %1197 = vmatpush1.bf16.msra.mxu0 0
        %1198 = vmatprep.subr.bf16.mxu0 0
        %1199 = vmatpush1.bf16.msra.mxu0 0
        %1200 = vmatprep.subr.bf16.mxu0 0
        %1201 = vmatpush1.bf16.msra.mxu0 0
        %1202 = vmatprep.subr.bf16.mxu0 0
        %1203 = vmatpush1.bf16.msra.mxu0 0
        %1204 = vmatprep.subr.bf16.mxu0 0
        %1205 = vmatpush1.bf16.msra.mxu0 0
        %1206 = vmatprep.subr.bf16.mxu0 0
        %1207 = vmatpush1.bf16.msra.mxu0 0
        %1208 = vmatprep.subr.bf16.mxu0 0
        %1209 = vmatpush1.bf16.msra.mxu0 0
        %1210 = vmatprep.subr.bf16.mxu0 0
        %1211 = vmatpush1.bf16.msra.mxu0 0
        %1212 = vmatprep.subr.bf16.mxu0 0
        %1213 = vmatpush1.bf16.msra.mxu0 0
        %1214 = vmatprep.mubr.bf16.mxu0 0
        %1215 = vmatmul.mubr.bf16.gmra.mrb[0].mxu0 %v1177
        %v1216 = vpop.f32.mrb[0].mxu0
        %v1217 = vadd.f32 0.0, %v1216
        %v1218 = vpop.f32.mrb[0].mxu0
        %v1219 = vpop.f32.mrb[0].mxu0
        %v1220 = vpop.f32.mrb[0].mxu0
        %1221 = vdwg.mxu0
        %1222 = vrot.lane.b32.xlu0 %v839, 64
        %v1223 = vpop.permute.xlu0 %1222
        %v1225 = vsel %vm843, %v1076, 0
        %v1228 = vsel %vm1082, %v1223, 0
        %1230 = vmatprep.subr.bf16.mxu0 0
        %1231 = vmatpush1.bf16.msra.mxu0 %v1228
        %1232 = vmatprep.subr.bf16.mxu0 0
        %1233 = vmatpush1.bf16.msra.mxu0 0
        %1234 = vmatprep.subr.bf16.mxu0 0
        %1235 = vmatpush1.bf16.msra.mxu0 0
        %1236 = vmatprep.subr.bf16.mxu0 0
        %1237 = vmatpush1.bf16.msra.mxu0 0
        %1238 = vmatprep.subr.bf16.mxu0 0
        %1239 = vmatpush1.bf16.msra.mxu0 0
        %1240 = vmatprep.subr.bf16.mxu0 0
        %1241 = vmatpush1.bf16.msra.mxu0 0
        %1242 = vmatprep.subr.bf16.mxu0 0
        %1243 = vmatpush1.bf16.msra.mxu0 0
        %1244 = vmatprep.subr.bf16.mxu0 0
        %1245 = vmatpush1.bf16.msra.mxu0 0
        %1246 = vmatprep.subr.bf16.mxu0 0
        %1247 = vmatpush1.bf16.msra.mxu0 0
        %1248 = vmatprep.subr.bf16.mxu0 0
        %1249 = vmatpush1.bf16.msra.mxu0 0
        %1250 = vmatprep.subr.bf16.mxu0 0
        %1251 = vmatpush1.bf16.msra.mxu0 0
        %1252 = vmatprep.subr.bf16.mxu0 0
        %1253 = vmatpush1.bf16.msra.mxu0 0
        %1254 = vmatprep.subr.bf16.mxu0 0
        %1255 = vmatpush1.bf16.msra.mxu0 0
        %1256 = vmatprep.subr.bf16.mxu0 0
        %1257 = vmatpush1.bf16.msra.mxu0 0
        %1258 = vmatprep.subr.bf16.mxu0 0
        %1259 = vmatpush1.bf16.msra.mxu0 0
        %1260 = vmatprep.subr.bf16.mxu0 0
        %1261 = vmatpush1.bf16.msra.mxu0 0
        %1262 = vmatprep.mubr.bf16.mxu0 0
        %1263 = vmatmul.mubr.bf16.gmra.mrb[0].mxu0 %v1225
        %v1264 = vpop.f32.mrb[0].mxu0
        %v1265 = vadd.f32 0.0, %v1264
        %v1266 = vpop.f32.mrb[0].mxu0
        %v1267 = vpop.f32.mrb[0].mxu0
        %v1268 = vpop.f32.mrb[0].mxu0
        %1269 = vdwg.mxu0
        %v1270 = vrcp.pop %v1063
        %v1271 = vrcp.pop %v1066
        %v1272 = vrcp.pop %v1069
        %v1273 = vrcp.pop %v1072
        %v1274 = vmul.f32 %v1121, %v1270
        %v1275 = vmul.f32 %v1169, %v1271
        %v1276 = vmul.f32 %v1217, %v1272
        %v1277 = vmul.f32 %v1265, %v1273
        %1279 = vrot.lane.b32.xlu0 %v1275, 8
        %v1280 = vpop.permute.xlu0 %1279
        %1283 = vrot.lane.b32.xlu0 %v1276, 16
        %v1284 = vpop.permute.xlu0 %1283
        %1287 = vrot.lane.b32.xlu0 %v1277, 24
        %v1288 = vpop.permute.xlu0 %1287
        %v1290 = vsel %vm843, %v1274, %v1280
        %vm1291 = vcmask 130048
        %v1292 = vsel %vm1291, %v1290, %v1284
        %vm1293 = vcmask 195584
        %v1294 = vsel %vm1293, %v1292, %v1288
        %v1295 = vpack.c.bf16 %v1294, %v1294
        %v1296 = vld [vmem:[%s714] sm:$0xf]
        %v1297 = vld [vmem:[%s714 + $0x4] sm:$0xf]
        %v1298 = vld [vmem:[%s714 + $0x8] sm:$0xf]
        %v1299 = vld [vmem:[%s714 + $0xc] sm:$0xf]
        %v1300 = vld [vmem:[%s587] sm:$0x1]
        %v1302 = vlaneseq
        %v1303 = vshrl.u32 %v1302, 7
        %v1304 = vsub.s32 0, %v1303
        %v1305 = vrot.slane %v1300, %v1304
        %v1311 = vunpack.c.l.b16 %v1296
        %v1312 = vunpack.c.l.b16 %v1297
        %v1313 = vunpack.c.l.b16 %v1298
        %v1314 = vunpack.c.l.b16 %v1299
        %v1315 = vpack.c.b16 %v1312, %v1311
        %v1316 = vpack.c.b16 %v1314, %v1313
        %v1320 = vsel %vm767, %v1295, 0
        %1322 = vmatprep.subr.bf16.mxu0 0
        %1323 = vmatpush1.bf16.msra.mxu0 %v1315
        %1324 = vmatprep.subr.bf16.mxu0 0
        %1325 = vmatpush1.bf16.msra.mxu0 %v1316
        %1326 = vmatprep.subr.bf16.mxu0 0
        %1327 = vmatpush1.bf16.msra.mxu0 0
        %1328 = vmatprep.subr.bf16.mxu0 0
        %1329 = vmatpush1.bf16.msra.mxu0 0
        %1330 = vmatprep.subr.bf16.mxu0 0
        %1331 = vmatpush1.bf16.msra.mxu0 0
        %1332 = vmatprep.subr.bf16.mxu0 0
        %1333 = vmatpush1.bf16.msra.mxu0 0
        %1334 = vmatprep.subr.bf16.mxu0 0
        %1335 = vmatpush1.bf16.msra.mxu0 0
        %1336 = vmatprep.subr.bf16.mxu0 0
        %1337 = vmatpush1.bf16.msra.mxu0 0
        %1338 = vmatprep.subr.bf16.mxu0 0
        %1339 = vmatpush1.bf16.msra.mxu0 0
        %1340 = vmatprep.subr.bf16.mxu0 0
        %1341 = vmatpush1.bf16.msra.mxu0 0
        %1342 = vmatprep.subr.bf16.mxu0 0
        %1343 = vmatpush1.bf16.msra.mxu0 0
        %1344 = vmatprep.subr.bf16.mxu0 0
        %1345 = vmatpush1.bf16.msra.mxu0 0
        %1346 = vmatprep.subr.bf16.mxu0 0
        %1347 = vmatpush1.bf16.msra.mxu0 0
        %1348 = vmatprep.subr.bf16.mxu0 0
        %1349 = vmatpush1.bf16.msra.mxu0 0
        %1350 = vmatprep.subr.bf16.mxu0 0
        %1351 = vmatpush1.bf16.msra.mxu0 0
        %1352 = vmatprep.subr.bf16.mxu0 0
        %1353 = vmatpush1.bf16.msra.mxu0 0
        %1354 = vmatprep.mubr.bf16.mxu0 0
        %1355 = vmatmul.mubr.bf16.gmra.mrb[0].mxu0 %v1320
        %v1356 = vpop.f32.mrb[0].mxu0
        %v1357 = vadd.f32 %v1305, %v1356
        %v1358 = vpop.f32.mrb[0].mxu0
        %v1359 = vpop.f32.mrb[0].mxu0
        %v1360 = vpop.f32.mrb[0].mxu0
        %1361 = vdwg.mxu0
        %v1362 = vadd.f32 %v742, %v1357
        %v1363 = vld [vmem:[%s595] sm:$0x1]
        %v1364 = vld [vmem:[%s603] sm:$0x1]
        %v1365 = vsel %vm767, %v1362, 0.0
        %1366 = vadd.xlane.f32.xlu0 %v1365
        %v1367 = vpop.xlane.xlu0 %1366
        %v1368 = vrcp.pop 32.0
        %v1369 = vmul.f32 %v1367, %v1368
        %v1370 = vsub.f32 %v1362, %v1369
        %v1371 = vmul.f32 %v1370, %v1370
        %v1372 = vsel %vm767, %v1371, 0.0
        %1373 = vadd.xlane.f32.xlu0 %v1372
        %v1374 = vpop.xlane.xlu0 %1373
        %v1375 = vmul.f32 %v1374, %v1368
        %v1376 = vadd.f32 %v1375, 1e-05
        %v1377 = vrsqrt.pop %v1376
        %v1378 = vmul.f32 %v1370, %v1377
        %v1380 = vlaneseq
        %v1381 = vshrl.u32 %v1380, 7
        %v1382 = vsub.s32 0, %v1381
        %v1383 = vrot.slane %v1363, %v1382
        %v1385 = vmul.f32 %v1378, %v1383
        %v1387 = vlaneseq
        %v1388 = vshrl.u32 %v1387, 7
        %v1389 = vsub.s32 0, %v1388
        %v1390 = vrot.slane %v1364, %v1389
        %v1392 = vadd.f32 %v1385, %v1390
        %v1393 = vpack.c.bf16 %v1392, %v1392
        %v1394 = vld [vmem:[%s719] sm:$0xf]
        %v1395 = vld [vmem:[%s719 + $0x4] sm:$0xf]
        %v1396 = vld [vmem:[%s719 + $0x8] sm:$0xf]
        %v1397 = vld [vmem:[%s719 + $0xc] sm:$0xf]
        %v1398 = vld [vmem:[%s611] sm:$0x1]
        %v1400 = vlaneseq
        %v1401 = vshrl.u32 %v1400, 7
        %v1402 = vsub.s32 0, %v1401
        %v1403 = vrot.slane %v1398, %v1402
        %v1409 = vunpack.c.l.b16 %v1394
        %v1410 = vunpack.c.l.b16 %v1395
        %v1411 = vunpack.c.l.b16 %v1396
        %v1412 = vunpack.c.l.b16 %v1397
        %v1413 = vpack.c.b16 %v1410, %v1409
        %v1414 = vpack.c.b16 %v1412, %v1411
        %v1418 = vsel %vm767, %v1393, 0
        %1420 = vmatprep.subr.bf16.mxu0 0
        %1421 = vmatpush1.bf16.msra.mxu0 %v1413
        %1422 = vmatprep.subr.bf16.mxu0 0
        %1423 = vmatpush1.bf16.msra.mxu0 %v1414
        %1424 = vmatprep.subr.bf16.mxu0 0
        %1425 = vmatpush1.bf16.msra.mxu0 0
        %1426 = vmatprep.subr.bf16.mxu0 0
        %1427 = vmatpush1.bf16.msra.mxu0 0
        %1428 = vmatprep.subr.bf16.mxu0 0
        %1429 = vmatpush1.bf16.msra.mxu0 0
        %1430 = vmatprep.subr.bf16.mxu0 0
        %1431 = vmatpush1.bf16.msra.mxu0 0
        %1432 = vmatprep.subr.bf16.mxu0 0
        %1433 = vmatpush1.bf16.msra.mxu0 0
        %1434 = vmatprep.subr.bf16.mxu0 0
        %1435 = vmatpush1.bf16.msra.mxu0 0
        %1436 = vmatprep.subr.bf16.mxu0 0
        %1437 = vmatpush1.bf16.msra.mxu0 0
        %1438 = vmatprep.subr.bf16.mxu0 0
        %1439 = vmatpush1.bf16.msra.mxu0 0
        %1440 = vmatprep.subr.bf16.mxu0 0
        %1441 = vmatpush1.bf16.msra.mxu0 0
        %1442 = vmatprep.subr.bf16.mxu0 0
        %1443 = vmatpush1.bf16.msra.mxu0 0
        %1444 = vmatprep.subr.bf16.mxu0 0
        %1445 = vmatpush1.bf16.msra.mxu0 0
        %1446 = vmatprep.subr.bf16.mxu0 0
        %1447 = vmatpush1.bf16.msra.mxu0 0
        %1448 = vmatprep.subr.bf16.mxu0 0
        %1449 = vmatpush1.bf16.msra.mxu0 0
        %1450 = vmatprep.subr.bf16.mxu0 0
        %1451 = vmatpush1.bf16.msra.mxu0 0
        %1452 = vmatprep.mubr.bf16.mxu0 0
        %1453 = vmatmul.mubr.bf16.gmra.mrb[0].mxu0 %v1418
        %v1454 = vpop.f32.mrb[0].mxu0
        %v1455 = vadd.f32 %v1403, %v1454
        %v1456 = vpop.f32.mrb[0].mxu0
        %v1457 = vpop.f32.mrb[0].mxu0
        %v1458 = vpop.f32.mrb[0].mxu0
        %1459 = vdwg.mxu0
        %v1460 = vmax.f32 %v1455, 0.0
        %v1461 = vpack.c.bf16 %v1460, %v1460
        %v1462 = vld [vmem:[%s724] sm:$0xf]
        %v1463 = vld [vmem:[%s724 + $0x4] sm:$0xf]
        %v1464 = vld [vmem:[%s724 + $0x8] sm:$0xf]
        %v1465 = vld [vmem:[%s724 + $0xc] sm:$0xf]
        %v1466 = vld [vmem:[%s724 + $0x10] sm:$0xf]
        %v1467 = vld [vmem:[%s724 + $0x14] sm:$0xf]
        %v1468 = vld [vmem:[%s724 + $0x18] sm:$0xf]
        %v1469 = vld [vmem:[%s724 + $0x1c] sm:$0xf]
        %v1470 = vld [vmem:[%s727] sm:$0x1]
        %v1472 = vlaneseq
        %v1473 = vshrl.u32 %v1472, 7
        %v1474 = vsub.s32 0, %v1473
        %v1475 = vrot.slane %v1470, %v1474
        %v1485 = vunpack.c.l.b16 %v1462
        %v1486 = vunpack.c.l.b16 %v1463
        %v1487 = vunpack.c.l.b16 %v1464
        %v1488 = vunpack.c.l.b16 %v1465
        %v1489 = vunpack.c.l.b16 %v1466
        %v1490 = vunpack.c.l.b16 %v1467
        %v1491 = vunpack.c.l.b16 %v1468
        %v1492 = vunpack.c.l.b16 %v1469
        %v1493 = vpack.c.b16 %v1486, %v1485
        %v1494 = vpack.c.b16 %v1488, %v1487
        %v1495 = vpack.c.b16 %v1490, %v1489
        %v1496 = vpack.c.b16 %v1492, %v1491
        %vm1501 = vcmask 523264
        %v1503 = vsel %vm1501, %v1461, 0
        %1505 = vmatprep.subr.bf16.mxu0 0
        %1506 = vmatpush1.bf16.msra.mxu0 %v1493
        %1507 = vmatprep.subr.bf16.mxu0 0
        %1508 = vmatpush1.bf16.msra.mxu0 %v1494
        %1509 = vmatprep.subr.bf16.mxu0 0
        %1510 = vmatpush1.bf16.msra.mxu0 %v1495
        %1511 = vmatprep.subr.bf16.mxu0 0
        %1512 = vmatpush1.bf16.msra.mxu0 %v1496
        %1513 = vmatprep.subr.bf16.mxu0 0
        %1514 = vmatpush1.bf16.msra.mxu0 0
        %1515 = vmatprep.subr.bf16.mxu0 0
        %1516 = vmatpush1.bf16.msra.mxu0 0
        %1517 = vmatprep.subr.bf16.mxu0 0
        %1518 = vmatpush1.bf16.msra.mxu0 0
        %1519 = vmatprep.subr.bf16.mxu0 0
        %1520 = vmatpush1.bf16.msra.mxu0 0
        %1521 = vmatprep.subr.bf16.mxu0 0
        %1522 = vmatpush1.bf16.msra.mxu0 0
        %1523 = vmatprep.subr.bf16.mxu0 0
        %1524 = vmatpush1.bf16.msra.mxu0 0
        %1525 = vmatprep.subr.bf16.mxu0 0
        %1526 = vmatpush1.bf16.msra.mxu0 0
        %1527 = vmatprep.subr.bf16.mxu0 0
        %1528 = vmatpush1.bf16.msra.mxu0 0
        %1529 = vmatprep.subr.bf16.mxu0 0
        %1530 = vmatpush1.bf16.msra.mxu0 0
        %1531 = vmatprep.subr.bf16.mxu0 0
        %1532 = vmatpush1.bf16.msra.mxu0 0
        %1533 = vmatprep.subr.bf16.mxu0 0
        %1534 = vmatpush1.bf16.msra.mxu0 0
        %1535 = vmatprep.subr.bf16.mxu0 0
        %1536 = vmatpush1.bf16.msra.mxu0 0
        %1537 = vmatprep.mubr.bf16.mxu0 0
        %1538 = vmatmul.mubr.bf16.gmra.mrb[0].mxu0 %v1503
        %v1539 = vpop.f32.mrb[0].mxu0
        %v1540 = vadd.f32 %v1475, %v1539
        %v1541 = vpop.f32.mrb[0].mxu0
        %v1542 = vpop.f32.mrb[0].mxu0
        %v1543 = vpop.f32.mrb[0].mxu0
        %1544 = vdwg.mxu0
        %v1545 = vadd.f32 %v1392, %v1540
        %v1546 = vld [vmem:[%s730] sm:$0x1]
        %v1547 = vld [vmem:[%s733] sm:$0x1]
        %v1548 = vsel %vm767, %v1545, 0.0
        %1549 = vadd.xlane.f32.xlu0 %v1548
        %v1550 = vpop.xlane.xlu0 %1549
        %v1551 = vmul.f32 %v1550, %v1368
        %v1552 = vsub.f32 %v1545, %v1551
        %v1553 = vmul.f32 %v1552, %v1552
        %v1554 = vsel %vm767, %v1553, 0.0
        %1555 = vadd.xlane.f32.xlu0 %v1554
        %v1556 = vpop.xlane.xlu0 %1555
        %v1557 = vmul.f32 %v1556, %v1368
        %v1558 = vadd.f32 %v1557, 1e-05
        %v1559 = vrsqrt.pop %v1558
        %v1560 = vmul.f32 %v1552, %v1559
        %v1562 = vlaneseq
        %v1563 = vshrl.u32 %v1562, 7
        %v1564 = vsub.s32 0, %v1563
        %v1565 = vrot.slane %v1546, %v1564
        %v1567 = vmul.f32 %v1560, %v1565
        %v1569 = vlaneseq
        %v1570 = vshrl.u32 %v1569, 7
        %v1571 = vsub.s32 0, %v1570
        %v1572 = vrot.slane %v1547, %v1571
        %v1574 = vadd.f32 %v1567, %v1572
        %1575 = vst.msk [vmem:[%s701] sm:$0xff] %vm767, %v1574
        %s1576 = sand.u32 %s394, 1
        %s1577 = scalar_lea.sflag [#allocation4], %s1576
        %s1578 = sand.u32 %s394, 1
        %s1579 = smul.addr %s1578, 8
        %s1580 = scalar_lea.vmem [#allocation11], %s1579
        // Predicated region
        $region97: #{tpu_custom_call.1} parent=71 // pred_check
          %p1581 = pneg %p404
        $region98: #{tpu_custom_call.1} parent=71 // pred_check_branch
          %1583 = sbr.rel (%p1581) target = $region100
        $region99: #{tpu_custom_call.1} parent=71 // pred_region
          %s1585 = ssub.s32 128, 128
          %1586 = vsyncadd %s1577, %s1585
          %s1587 = smul.addr %s40, 128
          %s1588 = scalar_lea.hbm %s13, %s1587
          %s1590 = sshll.u32 %s1580, 4
          %s1591 = int_to_ptr.vmem [resolvable:$true] %s1590
          %1593 = dma.vmem_to_hbm [thread:$0]  %s1591, 128, %s1588, %s1577
        $region100: #{tpu_custom_call.1} parent=71 // pred_fallthru
          _
      $region72: #{tpu_custom_call.1} parent=5 // pred_fallthru
        _
      %p1594 = scmp.le.s32.totalorder 2, %s31
      // Predicated region
      $region101: #{tpu_custom_call.1} parent=5 // pred_check
        %p1595 = pneg %p1594
      $region102: #{tpu_custom_call.1} parent=5 // pred_check_branch
        %1597 = sbr.rel (%p1595) target = $region104
      $region103: #{tpu_custom_call.1} parent=5 // pred_region
        %s1598 = ssub.s32 %s31, 2
        // Predicated region
        $region105: #{tpu_custom_call.1} parent=103 // pred_check
          %p1599 = pneg %p410
        $region106: #{tpu_custom_call.1} parent=103 // pred_check_branch
          %1601 = sbr.rel (%p1599) target = $region108
        $region107: #{tpu_custom_call.1} parent=103 // pred_region
          %s1602 = sand.u32 %s395, 1
          %s1603 = scalar_lea.sflag [#allocation4], %s1602
          %s1604 = sand.u32 %s395, 1
          %s1605 = smul.addr %s1604, 8
          %s1606 = scalar_lea.vmem [#allocation11], %s1605
          %1607 = dma.done %s1603, 128
        $region108: #{tpu_custom_call.1} parent=103 // pred_fallthru
          _
      $region104: #{tpu_custom_call.1} parent=5 // pred_fallthru
        _
    $region6: #{tpu_custom_call.1} parent=1 // loop_footer
      %s35 = sadd.s32 1, %s31
    $region7: #{tpu_custom_call.1} parent=1 // loop_footer_branch
      %30 = sbr.rel target = $region3
    $region8: #{tpu_custom_call.1} parent=1 // loop_exit
      _
    %1608 = vsyncpa [#allocation3], 1
    %s1609 = scalar_lea.sflag [#allocation3], 1
    %1610 = vsyncpa %s1609, 1
    %1611 = vsyncpa [#allocation6], 1
    %s1612 = scalar_lea.sflag [#allocation6], 1
    %1613 = vsyncpa %s1612, 1
    %1614 = vsyncpa [#allocation9], 1
    %s1615 = scalar_lea.sflag [#allocation9], 1
    %1616 = vsyncpa %s1615, 1
    %1617 = vsyncpa [#allocation4], 1
    %s1618 = scalar_lea.sflag [#allocation4], 1
    %1619 = vsyncpa %s1618, 1

</llo_original>
